<compile_context>
chip_gen: v7x
topology: tpu7x:2x2x1
jax: 0.10.0
libtpu: 0.0.40
codegen_flags: <defaults>
</compile_context>

<pallas_src>
import jax
import jax.numpy as jnp
from jax import lax
from jax.experimental import pallas as pl
from jax.experimental.pallas import tpu as pltpu

EPS = 1e-3


def _bn_conv_bn_kernel(x_ref, w_ref, g1_ref, g2_ref, b2_ref, o_ref):
    # x_ref : (Cin, P)      full input slab (same block for every program)
    # w_ref : (tCout, Cin)  this program's slice of the 1x1 conv weight
    # g1_ref: (Cin, 1)      BN1 gamma (column -> broadcasts along lanes)
    # g2_ref: (tCout, 1)    BN2 gamma slice
    # b2_ref: (tCout, 1)    BN2 beta slice
    # o_ref : (tCout, P)    this program's output-channel slice of y^T
    x = x_ref[...].astype(jnp.float32)
    inv_p = 1.0 / x.shape[1]

    # ---- BN1 batch statistics: single pass over x ----
    s_x = jnp.sum(x, axis=1, keepdims=True)            # (Cin, 1)
    s_xx = jnp.sum(x * x, axis=1, keepdims=True)       # (Cin, 1)
    m1 = s_x * inv_p
    var1 = s_xx * inv_p - m1 * m1                      # biased var, E[x^2]-m^2
    s1 = g1_ref[...] * lax.rsqrt(var1 + EPS)           # (Cin, 1), EUP rsqrt
    # BN1 folded into the matmul operand with a single FMA (scale only; the
    # BN1 shift's contribution to the conv output equals BN2's mean and is
    # removed exactly by BN2's mean subtraction, so it never needs computing).
    xcs = x * s1 - m1 * s1                             # (Cin, P)

    # ---- 1x1 conv on the centered+scaled input (MXU):  yc = W @ xcs ----
    yc = jnp.dot(w_ref[...].astype(jnp.float32), xcs,
                 preferred_element_type=jnp.float32)   # (tCout, P), zero-mean over P

    # ---- BN2: stage yc through o_ref to bound its vreg live range ----
    o_ref[...] = yc.astype(o_ref.dtype)
    yc_s = o_ref[...].astype(jnp.float32)
    var2 = jnp.sum(yc_s * yc_s, axis=1, keepdims=True) * inv_p   # (tCout, 1)
    s2 = g2_ref[...] * lax.rsqrt(var2 + EPS)                     # (tCout, 1)
    o_ref[...] = (o_ref[...].astype(jnp.float32) * s2 + b2_ref[...]).astype(o_ref.dtype)


def _tpu_info():
    try:
        return pltpu.get_tpu_info()
    except Exception:
        return None


def _num_tensorcores_per_chip():
    """v7x has 2 TensorCores per chip; v5e / v6e have 1."""
    info = _tpu_info()
    if info is not None:
        for attr in ("num_cores", "core_count", "num_tensorcores", "tensorcore_count"):
            n = getattr(info, attr, None)
            if isinstance(n, int) and n > 0:
                return n
    try:
        kind = jax.devices()[0].device_kind.lower()
    except Exception:
        kind = ""
    return 2 if "7" in kind else 1


def _vmem_physical_bytes():
    info = _tpu_info()
    if info is not None:
        cap = getattr(info, "vmem_capacity_bytes", None)
        if isinstance(cap, int) and cap > 0:
            return cap
    return 64 * 1024 * 1024  # smallest per-TC VMEM across supported generations (v7x)


def bn_conv_bn(x_nchw, conv_w, g1, b1, g2, b2):
    """x_nchw: (N, Cin, H, W), conv_w: (Cout, Cin, 1, 1). Returns (N, Cout, H, W)."""
    del b1  # BN1 shift is removed exactly by BN2's mean subtraction (see kernel).
    N, Cin, H, W = x_nchw.shape
    Cout = conv_w.shape[0]
    P = N * H * W

    # NCHW -> (Cin, P).  For N == 1 this is a pure reshape (no data movement).
    if N == 1:
        x2d = x_nchw.reshape(Cin, P)
    else:
        # TODO(synk): N>1 should use a (N, Cin, H*W) block + grid axis with an
        # in-kernel BN1 accumulation instead of this HBM-round-trip transpose.
        x2d = jnp.moveaxis(x_nchw, 1, 0).reshape(Cin, P)
    w2d = conv_w.reshape(Cout, Cin)

    # Split Cout across programs only when the chip has 2 TensorCores (v7x);
    # on single-TC v5e/v6e a second grid step would just duplicate the BN1
    # reduction and add fixed step overhead.
    n_tc = _num_tensorcores_per_chip()
    n_blk = 2 if (n_tc >= 2 and Cout % 2 == 0 and (Cout // 2) % 8 == 0) else 1
    t_cout = Cout // n_blk

    # Per-chip VMEM budget; estimate counts double-buffered operands.
    itemsize = 4  # kernel computes in f32
    est = itemsize * (
        2 * Cin * P            # x slab (Pallas double-buffers even invariant blocks)
        + 2 * t_cout * Cin     # W slice x2
        + 2 * t_cout * P       # output slice x2
        + 2 * Cin + 4 * t_cout # per-channel vectors
    )
    est += 2 * 1024 * 1024     # spill / internal-scratch headroom
    budget = _vmem_physical_bytes() // 2
    if est > budget:
        # TODO(synk): tiled-P streaming path (two-pass BN statistics) for shapes
        # that exceed the per-chip VMEM budget (v7x's 64 MiB is hit first).
        raise NotImplementedError("problem too large for whole-array-resident kernel")
    vmem_limit = int(min(budget, max(est, 16 * 1024 * 1024)))

    out2d = pl.pallas_call(
        _bn_conv_bn_kernel,
        out_shape=jax.ShapeDtypeStruct((Cout, P), x_nchw.dtype),
        grid=(n_blk,),
        in_specs=[
            # TODO(synk): pipeline_mode=pl.Buffered(1) on the grid-invariant x /
            # g1 blocks once a tiled-P path makes VMEM the binding constraint.
            pl.BlockSpec((Cin, P), lambda j: (0, 0)),       # x: same block every step
            pl.BlockSpec((t_cout, Cin), lambda j: (j, 0)),  # conv weight slice
            pl.BlockSpec((Cin, 1), lambda j: (0, 0)),       # g1
            pl.BlockSpec((t_cout, 1), lambda j: (j, 0)),    # g2 slice
            pl.BlockSpec((t_cout, 1), lambda j: (j, 0)),    # b2 slice
        ],
        out_specs=pl.BlockSpec((t_cout, P), lambda j: (j, 0)),
        compiler_params=pltpu.CompilerParams(
            dimension_semantics=("parallel",),
            vmem_limit_bytes=vmem_limit),
    )(x2d, w2d, g1.reshape(Cin, 1), g2.reshape(Cout, 1), b2.reshape(Cout, 1))

    # TODO(synk): for large H*W, pad P up to a multiple of 128 (lane-dense
    # output stores, masked xcs tail, true-P divisors) and slice back here;
    # at P=196 the extra XLA pad/slice copies cost more than the masked vst.

    # (Cout, P) -> NCHW.  For N == 1 this is again a pure reshape.
    if N == 1:
        return out2d.reshape(1, Cout, H, W)
    return jnp.moveaxis(out2d.reshape(Cout, N, H, W), 0, 1)


def _reference(x_nchw, conv_w, g1, b1, g2, b2):
    """Pure-JAX reference mirroring PyTorch training-mode BN + 1x1 conv."""
    def bn(x, g, b):
        mean = jnp.mean(x, axis=(0, 2, 3), keepdims=True)
        var = jnp.mean((x - mean) ** 2, axis=(0, 2, 3), keepdims=True)
        return (x - mean) * lax.rsqrt(var + EPS) * g.reshape(1, -1, 1, 1) + b.reshape(
            1, -1, 1, 1
        )

    x = bn(x_nchw, g1, b1)
    y = jnp.einsum("nchw,oc->nohw", x, conv_w.reshape(conv_w.shape[0], conv_w.shape[1]))
    return bn(y, g2, b2)


if __name__ == "__main__":
    key = jax.random.PRNGKey(0)
    k_x, k_w, k_g1, k_b1, k_g2, k_b2 = jax.random.split(key, 6)

    N, Cin, H, W, Cout = 1, 128, 14, 14, 512

    x = jax.random.normal(k_x, (N, Cin, H, W), dtype=jnp.float32)
    conv_w = jax.random.normal(k_w, (Cout, Cin, 1, 1), dtype=jnp.float32) * 0.05
    gamma1 = 1.0 + 0.1 * jax.random.normal(k_g1, (Cin,), dtype=jnp.float32)
    beta1 = 0.1 * jax.random.normal(k_b1, (Cin,), dtype=jnp.float32)
    gamma2 = 1.0 + 0.1 * jax.random.normal(k_g2, (Cout,), dtype=jnp.float32)
    beta2 = 0.1 * jax.random.normal(k_b2, (Cout,), dtype=jnp.float32)

    out = bn_conv_bn(x, conv_w, gamma1, beta1, gamma2, beta2)
    out = jax.block_until_ready(out)

    ref = _reference(x, conv_w, gamma1, beta1, gamma2, beta2)
    assert out.shape == (N, Cout, H, W)
    assert jnp.allclose(out, ref, atol=1e-3, rtol=1e-3), "mismatch vs reference"

    print("KERNEL_OK")
</pallas_src>

<mosaic_0001>
module attributes {stable_mosaic.version = 11 : i64} {
  func.func @_bn_conv_bn_kernel(%arg0: i32, %arg1: memref<128x196xf32, #tpu.memory_space<vmem>>, %arg2: memref<512x128xf32, #tpu.memory_space<vmem>>, %arg3: memref<128x1xf32, #tpu.memory_space<vmem>>, %arg4: memref<512x1xf32, #tpu.memory_space<vmem>>, %arg5: memref<512x1xf32, #tpu.memory_space<vmem>>, %arg6: memref<512x196xf32, #tpu.memory_space<vmem>>) attributes {dimension_semantics = [#tpu.dimension_semantics<parallel>], iteration_bounds = array<i64: 1>, scalar_prefetch = 0 : i64, scratch_operands = 0 : i64, tpu.core_type = #tpu.core_type<tc>, window_params = [{pipeline_mode = #tpu.pipeline_mode<synchronous>, transform_indices = @transform_0, window_bounds = array<i64: 128, 196>}, {transform_indices = @transform_1, window_bounds = array<i64: 512, 128>}, {pipeline_mode = #tpu.pipeline_mode<synchronous>, transform_indices = @transform_2, window_bounds = array<i64: 128, 1>}, {transform_indices = @transform_3, window_bounds = array<i64: 512, 1>}, {transform_indices = @transform_4, window_bounds = array<i64: 512, 1>}, {transform_indices = @transform_5, window_bounds = array<i64: 512, 196>}]} {
    %c0 = arith.constant 0 : index
    %c0_0 = arith.constant 0 : index
    %0 = vector.load %arg1[%c0, %c0_0] : memref<128x196xf32, #tpu.memory_space<vmem>>, vector<128x196xf32>
    %cst = arith.constant dense<0.000000e+00> : vector<128xf32>
    %1 = vector.multi_reduction <add>, %0, %cst [1] : vector<128x196xf32> to vector<128xf32>
    %2 = vector.shape_cast %1 : vector<128xf32> to vector<128x1xf32>
    %3 = arith.mulf %0, %0 : vector<128x196xf32>
    %cst_1 = arith.constant dense<0.000000e+00> : vector<128xf32>
    %4 = vector.multi_reduction <add>, %3, %cst_1 [1] : vector<128x196xf32> to vector<128xf32>
    %5 = vector.shape_cast %4 : vector<128xf32> to vector<128x1xf32>
    %cst_2 = arith.constant 0.00510204071 : f32
    %6 = vector.broadcast %cst_2 : f32 to vector<128x1xf32>
    %7 = arith.mulf %2, %6 : vector<128x1xf32>
    %cst_3 = arith.constant 0.00510204071 : f32
    %8 = vector.broadcast %cst_3 : f32 to vector<128x1xf32>
    %9 = arith.mulf %5, %8 : vector<128x1xf32>
    %10 = arith.mulf %7, %7 : vector<128x1xf32>
    %11 = arith.subf %9, %10 : vector<128x1xf32>
    %c0_4 = arith.constant 0 : index
    %c0_5 = arith.constant 0 : index
    %12 = vector.load %arg3[%c0_4, %c0_5] : memref<128x1xf32, #tpu.memory_space<vmem>>, vector<128x1xf32>
    %cst_6 = arith.constant 1.000000e-03 : f32
    %13 = vector.broadcast %cst_6 : f32 to vector<128x1xf32>
    %14 = arith.addf %11, %13 : vector<128x1xf32>
    %15 = math.rsqrt %14 : vector<128x1xf32>
    %16 = arith.mulf %12, %15 : vector<128x1xf32>
    %17 = vector.broadcast %16 : vector<128x1xf32> to vector<128x196xf32>
    %18 = arith.mulf %0, %17 : vector<128x196xf32>
    %19 = arith.mulf %7, %16 : vector<128x1xf32>
    %20 = vector.broadcast %19 : vector<128x1xf32> to vector<128x196xf32>
    %21 = arith.subf %18, %20 : vector<128x196xf32>
    %c0_7 = arith.constant 0 : index
    %c0_8 = arith.constant 0 : index
    %22 = vector.load %arg2[%c0_7, %c0_8] : memref<512x128xf32, #tpu.memory_space<vmem>>, vector<512x128xf32>
    %cst_9 = arith.constant dense<0.000000e+00> : vector<512x196xf32>
    %23 = tpu.matmul %22, %21, %cst_9 {dimension_numbers = #tpu.dot_dimension_numbers<[1], [0], [0], [1], [0, 0, 1, 1], [], []>} : vector<512x128xf32>, vector<128x196xf32>, vector<512x196xf32> -> vector<512x196xf32>
    %c0_10 = arith.constant 0 : index
    %c0_11 = arith.constant 0 : index
    %24 = vector.load %arg6[%c0_10, %c0_11] : memref<512x196xf32, #tpu.memory_space<vmem>>, vector<512x196xf32>
    tpu.vector_store %arg6[%c0_10, %c0_11], %23 {strides = array<i32>} : memref<512x196xf32, #tpu.memory_space<vmem>>, vector<512x196xf32>,
    %c0_12 = arith.constant 0 : index
    %c0_13 = arith.constant 0 : index
    %25 = vector.load %arg6[%c0_12, %c0_13] : memref<512x196xf32, #tpu.memory_space<vmem>>, vector<512x196xf32>
    %26 = arith.mulf %25, %25 : vector<512x196xf32>
    %cst_14 = arith.constant dense<0.000000e+00> : vector<512xf32>
    %27 = vector.multi_reduction <add>, %26, %cst_14 [1] : vector<512x196xf32> to vector<512xf32>
    %28 = vector.shape_cast %27 : vector<512xf32> to vector<512x1xf32>
    %cst_15 = arith.constant 0.00510204071 : f32
    %29 = vector.broadcast %cst_15 : f32 to vector<512x1xf32>
    %30 = arith.mulf %28, %29 : vector<512x1xf32>
    %c0_16 = arith.constant 0 : index
    %c0_17 = arith.constant 0 : index
    %31 = vector.load %arg4[%c0_16, %c0_17] : memref<512x1xf32, #tpu.memory_space<vmem>>, vector<512x1xf32>
    %cst_18 = arith.constant 1.000000e-03 : f32
    %32 = vector.broadcast %cst_18 : f32 to vector<512x1xf32>
    %33 = arith.addf %30, %32 : vector<512x1xf32>
    %34 = math.rsqrt %33 : vector<512x1xf32>
    %35 = arith.mulf %31, %34 : vector<512x1xf32>
    %c0_19 = arith.constant 0 : index
    %c0_20 = arith.constant 0 : index
    %36 = vector.load %arg6[%c0_19, %c0_20] : memref<512x196xf32, #tpu.memory_space<vmem>>, vector<512x196xf32>
    %37 = vector.broadcast %35 : vector<512x1xf32> to vector<512x196xf32>
    %38 = arith.mulf %36, %37 : vector<512x196xf32>
    %c0_21 = arith.constant 0 : index
    %c0_22 = arith.constant 0 : index
    %39 = vector.load %arg5[%c0_21, %c0_22] : memref<512x1xf32, #tpu.memory_space<vmem>>, vector<512x1xf32>
    %40 = vector.broadcast %39 : vector<512x1xf32> to vector<512x196xf32>
    %41 = arith.addf %38, %40 : vector<512x196xf32>
    %c0_23 = arith.constant 0 : index
    %c0_24 = arith.constant 0 : index
    %42 = vector.load %arg6[%c0_23, %c0_24] : memref<512x196xf32, #tpu.memory_space<vmem>>, vector<512x196xf32>
    tpu.vector_store %arg6[%c0_23, %c0_24], %41 {strides = array<i32>} : memref<512x196xf32, #tpu.memory_space<vmem>>, vector<512x196xf32>,
    return
  }
  func.func @transform_0(%arg0: i32) -> (i32, i32) {
    %c0_i32 = arith.constant 0 : i32
    %c0_i32_0 = arith.constant 0 : i32
    %c0_i32_1 = arith.constant 0 : i32
    return %c0_i32, %c0_i32_0 : i32, i32
  }
  func.func @transform_1(%arg0: i32) -> (i32, i32) {
    %c0_i32 = arith.constant 0 : i32
    %c0_i32_0 = arith.constant 0 : i32
    return %arg0, %c0_i32 : i32, i32
  }
  func.func @transform_2(%arg0: i32) -> (i32, i32) {
    %c0_i32 = arith.constant 0 : i32
    %c0_i32_0 = arith.constant 0 : i32
    %c0_i32_1 = arith.constant 0 : i32
    return %c0_i32, %c0_i32_0 : i32, i32
  }
  func.func @transform_3(%arg0: i32) -> (i32, i32) {
    %c0_i32 = arith.constant 0 : i32
    %c0_i32_0 = arith.constant 0 : i32
    return %arg0, %c0_i32 : i32, i32
  }
  func.func @transform_4(%arg0: i32) -> (i32, i32) {
    %c0_i32 = arith.constant 0 : i32
    %c0_i32_0 = arith.constant 0 : i32
    return %arg0, %c0_i32 : i32, i32
  }
  func.func @transform_5(%arg0: i32) -> (i32, i32) {
    %c0_i32 = arith.constant 0 : i32
    %c0_i32_0 = arith.constant 0 : i32
    return %arg0, %c0_i32 : i32, i32
  }
}

</mosaic_0001>

<llo_original>
// kernel: tpu_custom_call.1
$region0: #{tpu_custom_call.1}
  #allocation0 [shape = 'u32[]', space=smem, size = 0x4, offset = 0x4, fixed_abs, tag = 'smem constant byte address 0x4 - core index']
  #allocation1 [shape = 'u32[144,128]{1,0:T(1,128)}', space=vmem, size = 0x12000, scoped, tag = 'internal scratch']
  %s0 = inlined_call_operand.vmem [shape: f32[128,196], index: 0, kind: input, shape index: {}]
  %s1 = inlined_call_operand.vmem [shape: f32[512,128], index: 1, kind: input, shape index: {}]
  %s2 = inlined_call_operand.vmem [shape: f32[128,1], index: 2, kind: input, shape index: {}]
  %s3 = inlined_call_operand.vmem [shape: f32[512,1], index: 3, kind: input, shape index: {}]
  %s4 = inlined_call_operand.vmem [shape: f32[512,1], index: 4, kind: input, shape index: {}]
  %s5 = inlined_call_operand.vmem [shape: f32[512,196], index: 5, kind: output, shape index: {}]
  %s6 = sld [smem:[#allocation0]]
  $region30: #{tpu_custom_call.1} parent=0
    _
  %s8 = ssub.s32 1, %s6
  %s9 = scalar_select 0, %s8, %s6
  // Predicated region
  $region2: #{tpu_custom_call.1} parent=0 // pred_check
    _
  $region3: #{tpu_custom_call.1} parent=0 // pred_check_branch
    %11 = sbr.rel (0) target = $region5
  $region4: #{tpu_custom_call.1} parent=0 // pred_region
    _
  $region5: #{tpu_custom_call.1} parent=0 // pred_fallthru
    _
  // Predicated region
  $region6: #{tpu_custom_call.1} parent=0 // pred_check
    _
  $region7: #{tpu_custom_call.1} parent=0 // pred_check_branch
    %13 = sbr.rel (0) target = $region9
  $region8: #{tpu_custom_call.1} parent=0 // pred_region
    _
  $region9: #{tpu_custom_call.1} parent=0 // pred_fallthru
    _
  // Predicated region
  $region10: #{tpu_custom_call.1} parent=0 // pred_check
    _
  $region11: #{tpu_custom_call.1} parent=0 // pred_check_branch
    %15 = sbr.rel (0) target = $region13
  $region12: #{tpu_custom_call.1} parent=0 // pred_region
    _
  $region13: #{tpu_custom_call.1} parent=0 // pred_fallthru
    _
  // Predicated region
  $region14: #{tpu_custom_call.1} parent=0 // pred_check
    _
  $region15: #{tpu_custom_call.1} parent=0 // pred_check_branch
    %17 = sbr.rel (0) target = $region17
  $region16: #{tpu_custom_call.1} parent=0 // pred_region
    _
  $region17: #{tpu_custom_call.1} parent=0 // pred_fallthru
    _
  // Predicated region
  $region18: #{tpu_custom_call.1} parent=0 // pred_check
    _
  $region19: #{tpu_custom_call.1} parent=0 // pred_check_branch
    %19 = sbr.rel (0) target = $region21
  $region20: #{tpu_custom_call.1} parent=0 // pred_region
    _
  $region21: #{tpu_custom_call.1} parent=0 // pred_fallthru
    _
  %v20 = vld [vmem:[%s0] sm:$0xff]
  %v21 = vld [vmem:[%s0 + $0x8] sm:$0xff]
  %v22 = vld [vmem:[%s0 + $0x10] sm:$0xff]
  %v23 = vld [vmem:[%s0 + $0x18] sm:$0xff]
  %v24 = vld [vmem:[%s0 + $0x20] sm:$0xff]
  %v25 = vld [vmem:[%s0 + $0x28] sm:$0xff]
  %v26 = vld [vmem:[%s0 + $0x30] sm:$0xff]
  %v27 = vld [vmem:[%s0 + $0x38] sm:$0xff]
  %v28 = vld [vmem:[%s0 + $0x40] sm:$0xff]
  %v29 = vld [vmem:[%s0 + $0x48] sm:$0xff]
  %v30 = vld [vmem:[%s0 + $0x50] sm:$0xff]
  %v31 = vld [vmem:[%s0 + $0x58] sm:$0xff]
  %v32 = vld [vmem:[%s0 + $0x60] sm:$0xff]
  %v33 = vld [vmem:[%s0 + $0x68] sm:$0xff]
  %v34 = vld [vmem:[%s0 + $0x70] sm:$0xff]
  %v35 = vld [vmem:[%s0 + $0x78] sm:$0xff]
  %v36 = vld [vmem:[%s0 + $0x80] sm:$0xff]
  %v37 = vld [vmem:[%s0 + $0x88] sm:$0xff]
  %v38 = vld [vmem:[%s0 + $0x90] sm:$0xff]
  %v39 = vld [vmem:[%s0 + $0x98] sm:$0xff]
  %v40 = vld [vmem:[%s0 + $0xa0] sm:$0xff]
  %v41 = vld [vmem:[%s0 + $0xa8] sm:$0xff]
  %v42 = vld [vmem:[%s0 + $0xb0] sm:$0xff]
  %v43 = vld [vmem:[%s0 + $0xb8] sm:$0xff]
  %v44 = vld [vmem:[%s0 + $0xc0] sm:$0xff]
  %v45 = vld [vmem:[%s0 + $0xc8] sm:$0xff]
  %v46 = vld [vmem:[%s0 + $0xd0] sm:$0xff]
  %v47 = vld [vmem:[%s0 + $0xd8] sm:$0xff]
  %v48 = vld [vmem:[%s0 + $0xe0] sm:$0xff]
  %v49 = vld [vmem:[%s0 + $0xe8] sm:$0xff]
  %v50 = vld [vmem:[%s0 + $0xf0] sm:$0xff]
  %v51 = vld [vmem:[%s0 + $0xf8] sm:$0xff]
  %vm52 = vcmask 556032
  %v53 = vsel %vm52, %v21, 0.0
  %v54 = vadd.f32 %v20, %v53
  %55 = vadd.xlane.f32.xlu0 %v54
  %v56 = vpop.xlane.xlu0 %55
  %v57 = vsel %vm52, %v23, 0.0
  %v58 = vadd.f32 %v22, %v57
  %59 = vadd.xlane.f32.xlu0 %v58
  %v60 = vpop.xlane.xlu0 %59
  %v61 = vsel %vm52, %v25, 0.0
  %v62 = vadd.f32 %v24, %v61
  %63 = vadd.xlane.f32.xlu0 %v62
  %v64 = vpop.xlane.xlu0 %63
  %v65 = vsel %vm52, %v27, 0.0
  %v66 = vadd.f32 %v26, %v65
  %67 = vadd.xlane.f32.xlu0 %v66
  %v68 = vpop.xlane.xlu0 %67
  %v69 = vsel %vm52, %v29, 0.0
  %v70 = vadd.f32 %v28, %v69
  %71 = vadd.xlane.f32.xlu0 %v70
  %v72 = vpop.xlane.xlu0 %71
  %v73 = vsel %vm52, %v31, 0.0
  %v74 = vadd.f32 %v30, %v73
  %75 = vadd.xlane.f32.xlu0 %v74
  %v76 = vpop.xlane.xlu0 %75
  %v77 = vsel %vm52, %v33, 0.0
  %v78 = vadd.f32 %v32, %v77
  %79 = vadd.xlane.f32.xlu0 %v78
  %v80 = vpop.xlane.xlu0 %79
  %v81 = vsel %vm52, %v35, 0.0
  %v82 = vadd.f32 %v34, %v81
  %83 = vadd.xlane.f32.xlu0 %v82
  %v84 = vpop.xlane.xlu0 %83
  %v85 = vsel %vm52, %v37, 0.0
  %v86 = vadd.f32 %v36, %v85
  %87 = vadd.xlane.f32.xlu0 %v86
  %v88 = vpop.xlane.xlu0 %87
  %v89 = vsel %vm52, %v39, 0.0
  %v90 = vadd.f32 %v38, %v89
  %91 = vadd.xlane.f32.xlu0 %v90
  %v92 = vpop.xlane.xlu0 %91
  %v93 = vsel %vm52, %v41, 0.0
  %v94 = vadd.f32 %v40, %v93
  %95 = vadd.xlane.f32.xlu0 %v94
  %v96 = vpop.xlane.xlu0 %95
  %v97 = vsel %vm52, %v43, 0.0
  %v98 = vadd.f32 %v42, %v97
  %99 = vadd.xlane.f32.xlu0 %v98
  %v100 = vpop.xlane.xlu0 %99
  %v101 = vsel %vm52, %v45, 0.0
  %v102 = vadd.f32 %v44, %v101
  %103 = vadd.xlane.f32.xlu0 %v102
  %v104 = vpop.xlane.xlu0 %103
  %v105 = vsel %vm52, %v47, 0.0
  %v106 = vadd.f32 %v46, %v105
  %107 = vadd.xlane.f32.xlu0 %v106
  %v108 = vpop.xlane.xlu0 %107
  %v109 = vsel %vm52, %v49, 0.0
  %v110 = vadd.f32 %v48, %v109
  %111 = vadd.xlane.f32.xlu0 %v110
  %v112 = vpop.xlane.xlu0 %111
  %v113 = vsel %vm52, %v51, 0.0
  %v114 = vadd.f32 %v50, %v113
  %115 = vadd.xlane.f32.xlu0 %v114
  %v116 = vpop.xlane.xlu0 %115
  %v117 = vmul.f32 %v20, %v20
  %v118 = vmul.f32 %v21, %v21
  %v119 = vmul.f32 %v22, %v22
  %v120 = vmul.f32 %v23, %v23
  %v121 = vmul.f32 %v24, %v24
  %v122 = vmul.f32 %v25, %v25
  %v123 = vmul.f32 %v26, %v26
  %v124 = vmul.f32 %v27, %v27
  %v125 = vmul.f32 %v28, %v28
  %v126 = vmul.f32 %v29, %v29
  %v127 = vmul.f32 %v30, %v30
  %v128 = vmul.f32 %v31, %v31
  %v129 = vmul.f32 %v32, %v32
  %v130 = vmul.f32 %v33, %v33
  %v131 = vmul.f32 %v34, %v34
  %v132 = vmul.f32 %v35, %v35
  %v133 = vmul.f32 %v36, %v36
  %v134 = vmul.f32 %v37, %v37
  %v135 = vmul.f32 %v38, %v38
  %v136 = vmul.f32 %v39, %v39
  %v137 = vmul.f32 %v40, %v40
  %v138 = vmul.f32 %v41, %v41
  %v139 = vmul.f32 %v42, %v42
  %v140 = vmul.f32 %v43, %v43
  %v141 = vmul.f32 %v44, %v44
  %v142 = vmul.f32 %v45, %v45
  %v143 = vmul.f32 %v46, %v46
  %v144 = vmul.f32 %v47, %v47
  %v145 = vmul.f32 %v48, %v48
  %v146 = vmul.f32 %v49, %v49
  %v147 = vmul.f32 %v50, %v50
  %v148 = vmul.f32 %v51, %v51
  %v149 = vsel %vm52, %v118, 0.0
  %v150 = vadd.f32 %v117, %v149
  %151 = vadd.xlane.f32.xlu0 %v150
  %v152 = vpop.xlane.xlu0 %151
  %v153 = vsel %vm52, %v120, 0.0
  %v154 = vadd.f32 %v119, %v153
  %155 = vadd.xlane.f32.xlu0 %v154
  %v156 = vpop.xlane.xlu0 %155
  %v157 = vsel %vm52, %v122, 0.0
  %v158 = vadd.f32 %v121, %v157
  %159 = vadd.xlane.f32.xlu0 %v158
  %v160 = vpop.xlane.xlu0 %159
  %v161 = vsel %vm52, %v124, 0.0
  %v162 = vadd.f32 %v123, %v161
  %163 = vadd.xlane.f32.xlu0 %v162
  %v164 = vpop.xlane.xlu0 %163
  %v165 = vsel %vm52, %v126, 0.0
  %v166 = vadd.f32 %v125, %v165
  %167 = vadd.xlane.f32.xlu0 %v166
  %v168 = vpop.xlane.xlu0 %167
  %v169 = vsel %vm52, %v128, 0.0
  %v170 = vadd.f32 %v127, %v169
  %171 = vadd.xlane.f32.xlu0 %v170
  %v172 = vpop.xlane.xlu0 %171
  %v173 = vsel %vm52, %v130, 0.0
  %v174 = vadd.f32 %v129, %v173
  %175 = vadd.xlane.f32.xlu0 %v174
  %v176 = vpop.xlane.xlu0 %175
  %v177 = vsel %vm52, %v132, 0.0
  %v178 = vadd.f32 %v131, %v177
  %179 = vadd.xlane.f32.xlu0 %v178
  %v180 = vpop.xlane.xlu0 %179
  %v181 = vsel %vm52, %v134, 0.0
  %v182 = vadd.f32 %v133, %v181
  %183 = vadd.xlane.f32.xlu0 %v182
  %v184 = vpop.xlane.xlu0 %183
  %v185 = vsel %vm52, %v136, 0.0
  %v186 = vadd.f32 %v135, %v185
  %187 = vadd.xlane.f32.xlu0 %v186
  %v188 = vpop.xlane.xlu0 %187
  %v189 = vsel %vm52, %v138, 0.0
  %v190 = vadd.f32 %v137, %v189
  %191 = vadd.xlane.f32.xlu0 %v190
  %v192 = vpop.xlane.xlu0 %191
  %v193 = vsel %vm52, %v140, 0.0
  %v194 = vadd.f32 %v139, %v193
  %195 = vadd.xlane.f32.xlu0 %v194
  %v196 = vpop.xlane.xlu0 %195
  %v197 = vsel %vm52, %v142, 0.0
  %v198 = vadd.f32 %v141, %v197
  %199 = vadd.xlane.f32.xlu0 %v198
  %v200 = vpop.xlane.xlu0 %199
  %v201 = vsel %vm52, %v144, 0.0
  %v202 = vadd.f32 %v143, %v201
  %203 = vadd.xlane.f32.xlu0 %v202
  %v204 = vpop.xlane.xlu0 %203
  %v205 = vsel %vm52, %v146, 0.0
  %v206 = vadd.f32 %v145, %v205
  %207 = vadd.xlane.f32.xlu0 %v206
  %v208 = vpop.xlane.xlu0 %207
  %v209 = vsel %vm52, %v148, 0.0
  %v210 = vadd.f32 %v147, %v209
  %211 = vadd.xlane.f32.xlu0 %v210
  %v212 = vpop.xlane.xlu0 %211
  %v213 = vmul.f32 %v56, 0.0051020407
  %v214 = vmul.f32 %v60, 0.0051020407
  %v215 = vmul.f32 %v64, 0.0051020407
  %v216 = vmul.f32 %v68, 0.0051020407
  %v217 = vmul.f32 %v72, 0.0051020407
  %v218 = vmul.f32 %v76, 0.0051020407
  %v219 = vmul.f32 %v80, 0.0051020407
  %v220 = vmul.f32 %v84, 0.0051020407
  %v221 = vmul.f32 %v88, 0.0051020407
  %v222 = vmul.f32 %v92, 0.0051020407
  %v223 = vmul.f32 %v96, 0.0051020407
  %v224 = vmul.f32 %v100, 0.0051020407
  %v225 = vmul.f32 %v104, 0.0051020407
  %v226 = vmul.f32 %v108, 0.0051020407
  %v227 = vmul.f32 %v112, 0.0051020407
  %v228 = vmul.f32 %v116, 0.0051020407
  %v229 = vmul.f32 %v152, 0.0051020407
  %v230 = vmul.f32 %v156, 0.0051020407
  %v231 = vmul.f32 %v160, 0.0051020407
  %v232 = vmul.f32 %v164, 0.0051020407
  %v233 = vmul.f32 %v168, 0.0051020407
  %v234 = vmul.f32 %v172, 0.0051020407
  %v235 = vmul.f32 %v176, 0.0051020407
  %v236 = vmul.f32 %v180, 0.0051020407
  %v237 = vmul.f32 %v184, 0.0051020407
  %v238 = vmul.f32 %v188, 0.0051020407
  %v239 = vmul.f32 %v192, 0.0051020407
  %v240 = vmul.f32 %v196, 0.0051020407
  %v241 = vmul.f32 %v200, 0.0051020407
  %v242 = vmul.f32 %v204, 0.0051020407
  %v243 = vmul.f32 %v208, 0.0051020407
  %v244 = vmul.f32 %v212, 0.0051020407
  %v245 = vmul.f32 %v213, %v213
  %v246 = vmul.f32 %v214, %v214
  %v247 = vmul.f32 %v215, %v215
  %v248 = vmul.f32 %v216, %v216
  %v249 = vmul.f32 %v217, %v217
  %v250 = vmul.f32 %v218, %v218
  %v251 = vmul.f32 %v219, %v219
  %v252 = vmul.f32 %v220, %v220
  %v253 = vmul.f32 %v221, %v221
  %v254 = vmul.f32 %v222, %v222
  %v255 = vmul.f32 %v223, %v223
  %v256 = vmul.f32 %v224, %v224
  %v257 = vmul.f32 %v225, %v225
  %v258 = vmul.f32 %v226, %v226
  %v259 = vmul.f32 %v227, %v227
  %v260 = vmul.f32 %v228, %v228
  %v261 = vsub.f32 %v229, %v245
  %v262 = vsub.f32 %v230, %v246
  %v263 = vsub.f32 %v231, %v247
  %v264 = vsub.f32 %v232, %v248
  %v265 = vsub.f32 %v233, %v249
  %v266 = vsub.f32 %v234, %v250
  %v267 = vsub.f32 %v235, %v251
  %v268 = vsub.f32 %v236, %v252
  %v269 = vsub.f32 %v237, %v253
  %v270 = vsub.f32 %v238, %v254
  %v271 = vsub.f32 %v239, %v255
  %v272 = vsub.f32 %v240, %v256
  %v273 = vsub.f32 %v241, %v257
  %v274 = vsub.f32 %v242, %v258
  %v275 = vsub.f32 %v243, %v259
  %v276 = vsub.f32 %v244, %v260
  %v277 = vld [vmem:[%s2] sm:$0xff]
  %v278 = vld [vmem:[%s2 + $0x8] sm:$0xff]
  %v279 = vld [vmem:[%s2 + $0x10] sm:$0xff]
  %v280 = vld [vmem:[%s2 + $0x18] sm:$0xff]
  %v281 = vld [vmem:[%s2 + $0x20] sm:$0xff]
  %v282 = vld [vmem:[%s2 + $0x28] sm:$0xff]
  %v283 = vld [vmem:[%s2 + $0x30] sm:$0xff]
  %v284 = vld [vmem:[%s2 + $0x38] sm:$0xff]
  %v285 = vld [vmem:[%s2 + $0x40] sm:$0xff]
  %v286 = vld [vmem:[%s2 + $0x48] sm:$0xff]
  %v287 = vld [vmem:[%s2 + $0x50] sm:$0xff]
  %v288 = vld [vmem:[%s2 + $0x58] sm:$0xff]
  %v289 = vld [vmem:[%s2 + $0x60] sm:$0xff]
  %v290 = vld [vmem:[%s2 + $0x68] sm:$0xff]
  %v291 = vld [vmem:[%s2 + $0x70] sm:$0xff]
  %v292 = vld [vmem:[%s2 + $0x78] sm:$0xff]
  %v293 = vadd.f32 %v261, 0.001
  %v294 = vadd.f32 %v262, 0.001
  %v295 = vadd.f32 %v263, 0.001
  %v296 = vadd.f32 %v264, 0.001
  %v297 = vadd.f32 %v265, 0.001
  %v298 = vadd.f32 %v266, 0.001
  %v299 = vadd.f32 %v267, 0.001
  %v300 = vadd.f32 %v268, 0.001
  %v301 = vadd.f32 %v269, 0.001
  %v302 = vadd.f32 %v270, 0.001
  %v303 = vadd.f32 %v271, 0.001
  %v304 = vadd.f32 %v272, 0.001
  %v305 = vadd.f32 %v273, 0.001
  %v306 = vadd.f32 %v274, 0.001
  %v307 = vadd.f32 %v275, 0.001
  %v308 = vadd.f32 %v276, 0.001
  %v309 = vrsqrt.pop %v293
  %v310 = vrsqrt.pop %v294
  %v311 = vrsqrt.pop %v295
  %v312 = vrsqrt.pop %v296
  %v313 = vrsqrt.pop %v297
  %v314 = vrsqrt.pop %v298
  %v315 = vrsqrt.pop %v299
  %v316 = vrsqrt.pop %v300
  %v317 = vrsqrt.pop %v301
  %v318 = vrsqrt.pop %v302
  %v319 = vrsqrt.pop %v303
  %v320 = vrsqrt.pop %v304
  %v321 = vrsqrt.pop %v305
  %v322 = vrsqrt.pop %v306
  %v323 = vrsqrt.pop %v307
  %v324 = vrsqrt.pop %v308
  %v325 = vmul.f32 %v277, %v309
  %v326 = vmul.f32 %v278, %v310
  %v327 = vmul.f32 %v279, %v311
  %v328 = vmul.f32 %v280, %v312
  %v329 = vmul.f32 %v281, %v313
  %v330 = vmul.f32 %v282, %v314
  %v331 = vmul.f32 %v283, %v315
  %v332 = vmul.f32 %v284, %v316
  %v333 = vmul.f32 %v285, %v317
  %v334 = vmul.f32 %v286, %v318
  %v335 = vmul.f32 %v287, %v319
  %v336 = vmul.f32 %v288, %v320
  %v337 = vmul.f32 %v289, %v321
  %v338 = vmul.f32 %v290, %v322
  %v339 = vmul.f32 %v291, %v323
  %v340 = vmul.f32 %v292, %v324
  %342 = vset.pattern.permute.xlu0 0
  %343 = vperm.xlu0 %342, %v325
  %v344 = vpop.permute.xlu0 %343
  %347 = vset.pattern.permute.xlu0 0
  %348 = vperm.xlu0 %347, %v326
  %v349 = vpop.permute.xlu0 %348
  %352 = vset.pattern.permute.xlu0 0
  %353 = vperm.xlu0 %352, %v327
  %v354 = vpop.permute.xlu0 %353
  %357 = vset.pattern.permute.xlu0 0
  %358 = vperm.xlu0 %357, %v328
  %v359 = vpop.permute.xlu0 %358
  %362 = vset.pattern.permute.xlu0 0
  %363 = vperm.xlu0 %362, %v329
  %v364 = vpop.permute.xlu0 %363
  %367 = vset.pattern.permute.xlu0 0
  %368 = vperm.xlu0 %367, %v330
  %v369 = vpop.permute.xlu0 %368
  %372 = vset.pattern.permute.xlu0 0
  %373 = vperm.xlu0 %372, %v331
  %v374 = vpop.permute.xlu0 %373
  %377 = vset.pattern.permute.xlu0 0
  %378 = vperm.xlu0 %377, %v332
  %v379 = vpop.permute.xlu0 %378
  %382 = vset.pattern.permute.xlu0 0
  %383 = vperm.xlu0 %382, %v333
  %v384 = vpop.permute.xlu0 %383
  %387 = vset.pattern.permute.xlu0 0
  %388 = vperm.xlu0 %387, %v334
  %v389 = vpop.permute.xlu0 %388
  %392 = vset.pattern.permute.xlu0 0
  %393 = vperm.xlu0 %392, %v335
  %v394 = vpop.permute.xlu0 %393
  %397 = vset.pattern.permute.xlu0 0
  %398 = vperm.xlu0 %397, %v336
  %v399 = vpop.permute.xlu0 %398
  %402 = vset.pattern.permute.xlu0 0
  %403 = vperm.xlu0 %402, %v337
  %v404 = vpop.permute.xlu0 %403
  %407 = vset.pattern.permute.xlu0 0
  %408 = vperm.xlu0 %407, %v338
  %v409 = vpop.permute.xlu0 %408
  %412 = vset.pattern.permute.xlu0 0
  %413 = vperm.xlu0 %412, %v339
  %v414 = vpop.permute.xlu0 %413
  %417 = vset.pattern.permute.xlu0 0
  %418 = vperm.xlu0 %417, %v340
  %v419 = vpop.permute.xlu0 %418
  %v421 = vmul.f32 %v20, %v344
  %v422 = vmul.f32 %v21, %v344
  %v423 = vmul.f32 %v22, %v349
  %v424 = vmul.f32 %v23, %v349
  %v425 = vmul.f32 %v24, %v354
  %v426 = vmul.f32 %v25, %v354
  %v427 = vmul.f32 %v26, %v359
  %v428 = vmul.f32 %v27, %v359
  %v429 = vmul.f32 %v28, %v364
  %v430 = vmul.f32 %v29, %v364
  %v431 = vmul.f32 %v30, %v369
  %v432 = vmul.f32 %v31, %v369
  %v433 = vmul.f32 %v32, %v374
  %v434 = vmul.f32 %v33, %v374
  %v435 = vmul.f32 %v34, %v379
  %v436 = vmul.f32 %v35, %v379
  %v437 = vmul.f32 %v36, %v384
  %v438 = vmul.f32 %v37, %v384
  %v439 = vmul.f32 %v38, %v389
  %v440 = vmul.f32 %v39, %v389
  %v441 = vmul.f32 %v40, %v394
  %v442 = vmul.f32 %v41, %v394
  %v443 = vmul.f32 %v42, %v399
  %v444 = vmul.f32 %v43, %v399
  %v445 = vmul.f32 %v44, %v404
  %v446 = vmul.f32 %v45, %v404
  %v447 = vmul.f32 %v46, %v409
  %v448 = vmul.f32 %v47, %v409
  %v449 = vmul.f32 %v48, %v414
  %v450 = vmul.f32 %v49, %v414
  %v451 = vmul.f32 %v50, %v419
  %v452 = vmul.f32 %v51, %v419
  %v453 = vmul.f32 %v213, %v325
  %v454 = vmul.f32 %v214, %v326
  %v455 = vmul.f32 %v215, %v327
  %v456 = vmul.f32 %v216, %v328
  %v457 = vmul.f32 %v217, %v329
  %v458 = vmul.f32 %v218, %v330
  %v459 = vmul.f32 %v219, %v331
  %v460 = vmul.f32 %v220, %v332
  %v461 = vmul.f32 %v221, %v333
  %v462 = vmul.f32 %v222, %v334
  %v463 = vmul.f32 %v223, %v335
  %v464 = vmul.f32 %v224, %v336
  %v465 = vmul.f32 %v225, %v337
  %v466 = vmul.f32 %v226, %v338
  %v467 = vmul.f32 %v227, %v339
  %v468 = vmul.f32 %v228, %v340
  %470 = vset.pattern.permute.xlu0 0
  %471 = vperm.xlu0 %470, %v453
  %v472 = vpop.permute.xlu0 %471
  %475 = vset.pattern.permute.xlu0 0
  %476 = vperm.xlu0 %475, %v454
  %v477 = vpop.permute.xlu0 %476
  %480 = vset.pattern.permute.xlu0 0
  %481 = vperm.xlu0 %480, %v455
  %v482 = vpop.permute.xlu0 %481
  %485 = vset.pattern.permute.xlu0 0
  %486 = vperm.xlu0 %485, %v456
  %v487 = vpop.permute.xlu0 %486
  %490 = vset.pattern.permute.xlu0 0
  %491 = vperm.xlu0 %490, %v457
  %v492 = vpop.permute.xlu0 %491
  %495 = vset.pattern.permute.xlu0 0
  %496 = vperm.xlu0 %495, %v458
  %v497 = vpop.permute.xlu0 %496
  %500 = vset.pattern.permute.xlu0 0
  %501 = vperm.xlu0 %500, %v459
  %v502 = vpop.permute.xlu0 %501
  %505 = vset.pattern.permute.xlu0 0
  %506 = vperm.xlu0 %505, %v460
  %v507 = vpop.permute.xlu0 %506
  %510 = vset.pattern.permute.xlu0 0
  %511 = vperm.xlu0 %510, %v461
  %v512 = vpop.permute.xlu0 %511
  %515 = vset.pattern.permute.xlu0 0
  %516 = vperm.xlu0 %515, %v462
  %v517 = vpop.permute.xlu0 %516
  %520 = vset.pattern.permute.xlu0 0
  %521 = vperm.xlu0 %520, %v463
  %v522 = vpop.permute.xlu0 %521
  %525 = vset.pattern.permute.xlu0 0
  %526 = vperm.xlu0 %525, %v464
  %v527 = vpop.permute.xlu0 %526
  %530 = vset.pattern.permute.xlu0 0
  %531 = vperm.xlu0 %530, %v465
  %v532 = vpop.permute.xlu0 %531
  %535 = vset.pattern.permute.xlu0 0
  %536 = vperm.xlu0 %535, %v466
  %v537 = vpop.permute.xlu0 %536
  %540 = vset.pattern.permute.xlu0 0
  %541 = vperm.xlu0 %540, %v467
  %v542 = vpop.permute.xlu0 %541
  %545 = vset.pattern.permute.xlu0 0
  %546 = vperm.xlu0 %545, %v468
  %v547 = vpop.permute.xlu0 %546
  %v549 = vsub.f32 %v421, %v472
  %v550 = vsub.f32 %v422, %v472
  %v551 = vsub.f32 %v423, %v477
  %v552 = vsub.f32 %v424, %v477
  %v553 = vsub.f32 %v425, %v482
  %v554 = vsub.f32 %v426, %v482
  %v555 = vsub.f32 %v427, %v487
  %v556 = vsub.f32 %v428, %v487
  %v557 = vsub.f32 %v429, %v492
  %v558 = vsub.f32 %v430, %v492
  %v559 = vsub.f32 %v431, %v497
  %v560 = vsub.f32 %v432, %v497
  %v561 = vsub.f32 %v433, %v502
  %v562 = vsub.f32 %v434, %v502
  %v563 = vsub.f32 %v435, %v507
  %v564 = vsub.f32 %v436, %v507
  %v565 = vsub.f32 %v437, %v512
  %v566 = vsub.f32 %v438, %v512
  %v567 = vsub.f32 %v439, %v517
  %v568 = vsub.f32 %v440, %v517
  %v569 = vsub.f32 %v441, %v522
  %v570 = vsub.f32 %v442, %v522
  %v571 = vsub.f32 %v443, %v527
  %v572 = vsub.f32 %v444, %v527
  %v573 = vsub.f32 %v445, %v532
  %v574 = vsub.f32 %v446, %v532
  %v575 = vsub.f32 %v447, %v537
  %v576 = vsub.f32 %v448, %v537
  %v577 = vsub.f32 %v449, %v542
  %v578 = vsub.f32 %v450, %v542
  %v579 = vsub.f32 %v451, %v547
  %v580 = vsub.f32 %v452, %v547
  %v581 = vld [vmem:[%s1] sm:$0xff]
  %v582 = vld [vmem:[%s1 + $0x8] sm:$0xff]
  %v583 = vld [vmem:[%s1 + $0x10] sm:$0xff]
  %v584 = vld [vmem:[%s1 + $0x18] sm:$0xff]
  %v585 = vld [vmem:[%s1 + $0x20] sm:$0xff]
  %v586 = vld [vmem:[%s1 + $0x28] sm:$0xff]
  %v587 = vld [vmem:[%s1 + $0x30] sm:$0xff]
  %v588 = vld [vmem:[%s1 + $0x38] sm:$0xff]
  %v589 = vld [vmem:[%s1 + $0x40] sm:$0xff]
  %v590 = vld [vmem:[%s1 + $0x48] sm:$0xff]
  %v591 = vld [vmem:[%s1 + $0x50] sm:$0xff]
  %v592 = vld [vmem:[%s1 + $0x58] sm:$0xff]
  %v593 = vld [vmem:[%s1 + $0x60] sm:$0xff]
  %v594 = vld [vmem:[%s1 + $0x68] sm:$0xff]
  %v595 = vld [vmem:[%s1 + $0x70] sm:$0xff]
  %v596 = vld [vmem:[%s1 + $0x78] sm:$0xff]
  %v597 = vld [vmem:[%s1 + $0x80] sm:$0xff]
  %v598 = vld [vmem:[%s1 + $0x88] sm:$0xff]
  %v599 = vld [vmem:[%s1 + $0x90] sm:$0xff]
  %v600 = vld [vmem:[%s1 + $0x98] sm:$0xff]
  %v601 = vld [vmem:[%s1 + $0xa0] sm:$0xff]
  %v602 = vld [vmem:[%s1 + $0xa8] sm:$0xff]
  %v603 = vld [vmem:[%s1 + $0xb0] sm:$0xff]
  %v604 = vld [vmem:[%s1 + $0xb8] sm:$0xff]
  %v605 = vld [vmem:[%s1 + $0xc0] sm:$0xff]
  %v606 = vld [vmem:[%s1 + $0xc8] sm:$0xff]
  %v607 = vld [vmem:[%s1 + $0xd0] sm:$0xff]
  %v608 = vld [vmem:[%s1 + $0xd8] sm:$0xff]
  %v609 = vld [vmem:[%s1 + $0xe0] sm:$0xff]
  %v610 = vld [vmem:[%s1 + $0xe8] sm:$0xff]
  %v611 = vld [vmem:[%s1 + $0xf0] sm:$0xff]
  %v612 = vld [vmem:[%s1 + $0xf8] sm:$0xff]
  %v613 = vld [vmem:[%s1 + $0x100] sm:$0xff]
  %v614 = vld [vmem:[%s1 + $0x108] sm:$0xff]
  %v615 = vld [vmem:[%s1 + $0x110] sm:$0xff]
  %v616 = vld [vmem:[%s1 + $0x118] sm:$0xff]
  %v617 = vld [vmem:[%s1 + $0x120] sm:$0xff]
  %v618 = vld [vmem:[%s1 + $0x128] sm:$0xff]
  %v619 = vld [vmem:[%s1 + $0x130] sm:$0xff]
  %v620 = vld [vmem:[%s1 + $0x138] sm:$0xff]
  %v621 = vld [vmem:[%s1 + $0x140] sm:$0xff]
  %v622 = vld [vmem:[%s1 + $0x148] sm:$0xff]
  %v623 = vld [vmem:[%s1 + $0x150] sm:$0xff]
  %v624 = vld [vmem:[%s1 + $0x158] sm:$0xff]
  %v625 = vld [vmem:[%s1 + $0x160] sm:$0xff]
  %v626 = vld [vmem:[%s1 + $0x168] sm:$0xff]
  %v627 = vld [vmem:[%s1 + $0x170] sm:$0xff]
  %v628 = vld [vmem:[%s1 + $0x178] sm:$0xff]
  %v629 = vld [vmem:[%s1 + $0x180] sm:$0xff]
  %v630 = vld [vmem:[%s1 + $0x188] sm:$0xff]
  %v631 = vld [vmem:[%s1 + $0x190] sm:$0xff]
  %v632 = vld [vmem:[%s1 + $0x198] sm:$0xff]
  %v633 = vld [vmem:[%s1 + $0x1a0] sm:$0xff]
  %v634 = vld [vmem:[%s1 + $0x1a8] sm:$0xff]
  %v635 = vld [vmem:[%s1 + $0x1b0] sm:$0xff]
  %v636 = vld [vmem:[%s1 + $0x1b8] sm:$0xff]
  %v637 = vld [vmem:[%s1 + $0x1c0] sm:$0xff]
  %v638 = vld [vmem:[%s1 + $0x1c8] sm:$0xff]
  %v639 = vld [vmem:[%s1 + $0x1d0] sm:$0xff]
  %v640 = vld [vmem:[%s1 + $0x1d8] sm:$0xff]
  %v641 = vld [vmem:[%s1 + $0x1e0] sm:$0xff]
  %v642 = vld [vmem:[%s1 + $0x1e8] sm:$0xff]
  %v643 = vld [vmem:[%s1 + $0x1f0] sm:$0xff]
  %v644 = vld [vmem:[%s1 + $0x1f8] sm:$0xff]
  %645 = vmatprep.subr.mxu0 %v550
  %646 = vmatpush1.msra.mxu0 %v549
  %647 = vmatprep.subr.mxu0 %v552
  %648 = vmatpush1.msra.mxu0 %v551
  %649 = vmatprep.subr.mxu0 %v554
  %650 = vmatpush1.msra.mxu0 %v553
  %651 = vmatprep.subr.mxu0 %v556
  %652 = vmatpush1.msra.mxu0 %v555
  %653 = vmatprep.subr.mxu0 %v558
  %654 = vmatpush1.msra.mxu0 %v557
  %655 = vmatprep.subr.mxu0 %v560
  %656 = vmatpush1.msra.mxu0 %v559
  %657 = vmatprep.subr.mxu0 %v562
  %658 = vmatpush1.msra.mxu0 %v561
  %659 = vmatprep.subr.mxu0 %v564
  %660 = vmatpush1.msra.mxu0 %v563
  %661 = vmatprep.subr.mxu0 %v566
  %662 = vmatpush1.msra.mxu0 %v565
  %663 = vmatprep.subr.mxu0 %v568
  %664 = vmatpush1.msra.mxu0 %v567
  %665 = vmatprep.subr.mxu0 %v570
  %666 = vmatpush1.msra.mxu0 %v569
  %667 = vmatprep.subr.mxu0 %v572
  %668 = vmatpush1.msra.mxu0 %v571
  %669 = vmatprep.subr.mxu0 %v574
  %670 = vmatpush1.msra.mxu0 %v573
  %671 = vmatprep.subr.mxu0 %v576
  %672 = vmatpush1.msra.mxu0 %v575
  %673 = vmatprep.subr.mxu0 %v578
  %674 = vmatpush1.msra.mxu0 %v577
  %675 = vmatprep.subr.mxu0 %v580
  %676 = vmatpush1.msra.mxu0 %v579
  %677 = vmatprep.subr.mxu0 0.0
  %678 = vmatpush1.msra.mxu0 0.0
  %679 = vmatprep.subr.mxu0 0.0
  %680 = vmatpush1.msra.mxu0 0.0
  %681 = vmatprep.subr.mxu0 0.0
  %682 = vmatpush1.msra.mxu0 0.0
  %683 = vmatprep.subr.mxu0 0.0
  %684 = vmatpush1.msra.mxu0 0.0
  %685 = vmatprep.subr.mxu0 0.0
  %686 = vmatpush1.msra.mxu0 0.0
  %687 = vmatprep.subr.mxu0 0.0
  %688 = vmatpush1.msra.mxu0 0.0
  %689 = vmatprep.subr.mxu0 0.0
  %690 = vmatpush1.msra.mxu0 0.0
  %691 = vmatprep.subr.mxu0 0.0
  %692 = vmatpush1.msra.mxu0 0.0
  %693 = vmatprep.subr.mxu0 0.0
  %694 = vmatpush1.msra.mxu0 0.0
  %695 = vmatprep.subr.mxu0 0.0
  %696 = vmatpush1.msra.mxu0 0.0
  %697 = vmatprep.subr.mxu0 0.0
  %698 = vmatpush1.msra.mxu0 0.0
  %699 = vmatprep.subr.mxu0 0.0
  %700 = vmatpush1.msra.mxu0 0.0
  %701 = vmatprep.subr.mxu0 0.0
  %702 = vmatpush1.msra.mxu0 0.0
  %703 = vmatprep.subr.mxu0 0.0
  %704 = vmatpush1.msra.mxu0 0.0
  %705 = vmatprep.subr.mxu0 0.0
  %706 = vmatpush1.msra.mxu0 0.0
  %707 = vmatprep.subr.mxu0 0.0
  %708 = vmatpush1.msra.mxu0 0.0
  %709 = vmatprep.mubr.f32.mxu0 0.0
  %710 = vmatmul.mubr.f32.gmra.mrb[0].mxu0 %v581
  %v711 = vpop.f32.mrb[0].mxu0
  %v712 = vadd.f32 0.0, %v711
  %v713 = vpop.f32.mrb[0].mxu0
  %v714 = vadd.f32 0.0, %v713
  %715 = vmatprep.mubr.f32.mxu0 0.0
  %716 = vmatmul.mubr.f32.gmra.mrb[0].mxu0 %v582
  %v717 = vpop.f32.mrb[0].mxu0
  %v718 = vadd.f32 0.0, %v717
  %v719 = vpop.f32.mrb[0].mxu0
  %v720 = vadd.f32 0.0, %v719
  %721 = vmatprep.mubr.f32.mxu0 0.0
  %722 = vmatmul.mubr.f32.gmra.mrb[0].mxu0 %v583
  %v723 = vpop.f32.mrb[0].mxu0
  %v724 = vadd.f32 0.0, %v723
  %v725 = vpop.f32.mrb[0].mxu0
  %v726 = vadd.f32 0.0, %v725
  %727 = vmatprep.mubr.f32.mxu0 0.0
  %728 = vmatmul.mubr.f32.gmra.mrb[0].mxu0 %v584
  %v729 = vpop.f32.mrb[0].mxu0
  %v730 = vadd.f32 0.0, %v729
  %v731 = vpop.f32.mrb[0].mxu0
  %v732 = vadd.f32 0.0, %v731
  %733 = vmatprep.mubr.f32.mxu0 0.0
  %734 = vmatmul.mubr.f32.gmra.mrb[0].mxu0 %v585
  %v735 = vpop.f32.mrb[0].mxu0
  %v736 = vadd.f32 0.0, %v735
  %v737 = vpop.f32.mrb[0].mxu0
  %v738 = vadd.f32 0.0, %v737
  %739 = vmatprep.mubr.f32.mxu0 0.0
  %740 = vmatmul.mubr.f32.gmra.mrb[0].mxu0 %v586
  %v741 = vpop.f32.mrb[0].mxu0
  %v742 = vadd.f32 0.0, %v741
  %v743 = vpop.f32.mrb[0].mxu0
  %v744 = vadd.f32 0.0, %v743
  %745 = vmatprep.mubr.f32.mxu0 0.0
  %746 = vmatmul.mubr.f32.gmra.mrb[0].mxu0 %v587
  %v747 = vpop.f32.mrb[0].mxu0
  %v748 = vadd.f32 0.0, %v747
  %v749 = vpop.f32.mrb[0].mxu0
  %v750 = vadd.f32 0.0, %v749
  %751 = vmatprep.mubr.f32.mxu0 0.0
  %752 = vmatmul.mubr.f32.gmra.mrb[0].mxu0 %v588
  %v753 = vpop.f32.mrb[0].mxu0
  %v754 = vadd.f32 0.0, %v753
  %v755 = vpop.f32.mrb[0].mxu0
  %v756 = vadd.f32 0.0, %v755
  %757 = vmatprep.mubr.f32.mxu0 0.0
  %758 = vmatmul.mubr.f32.gmra.mrb[0].mxu0 %v589
  %v759 = vpop.f32.mrb[0].mxu0
  %v760 = vadd.f32 0.0, %v759
  %v761 = vpop.f32.mrb[0].mxu0
  %v762 = vadd.f32 0.0, %v761
  %763 = vmatprep.mubr.f32.mxu0 0.0
  %764 = vmatmul.mubr.f32.gmra.mrb[0].mxu0 %v590
  %v765 = vpop.f32.mrb[0].mxu0
  %v766 = vadd.f32 0.0, %v765
  %v767 = vpop.f32.mrb[0].mxu0
  %v768 = vadd.f32 0.0, %v767
  %769 = vmatprep.mubr.f32.mxu0 0.0
  %770 = vmatmul.mubr.f32.gmra.mrb[0].mxu0 %v591
  %v771 = vpop.f32.mrb[0].mxu0
  %v772 = vadd.f32 0.0, %v771
  %v773 = vpop.f32.mrb[0].mxu0
  %v774 = vadd.f32 0.0, %v773
  %775 = vmatprep.mubr.f32.mxu0 0.0
  %776 = vmatmul.mubr.f32.gmra.mrb[0].mxu0 %v592
  %v777 = vpop.f32.mrb[0].mxu0
  %v778 = vadd.f32 0.0, %v777
  %v779 = vpop.f32.mrb[0].mxu0
  %v780 = vadd.f32 0.0, %v779
  %781 = vmatprep.mubr.f32.mxu0 0.0
  %782 = vmatmul.mubr.f32.gmra.mrb[0].mxu0 %v593
  %v783 = vpop.f32.mrb[0].mxu0
  %v784 = vadd.f32 0.0, %v783
  %v785 = vpop.f32.mrb[0].mxu0
  %v786 = vadd.f32 0.0, %v785
  %787 = vmatprep.mubr.f32.mxu0 0.0
  %788 = vmatmul.mubr.f32.gmra.mrb[0].mxu0 %v594
  %v789 = vpop.f32.mrb[0].mxu0
  %v790 = vadd.f32 0.0, %v789
  %v791 = vpop.f32.mrb[0].mxu0
  %v792 = vadd.f32 0.0, %v791
  %793 = vmatprep.mubr.f32.mxu0 0.0
  %794 = vmatmul.mubr.f32.gmra.mrb[0].mxu0 %v595
  %v795 = vpop.f32.mrb[0].mxu0
  %v796 = vadd.f32 0.0, %v795
  %v797 = vpop.f32.mrb[0].mxu0
  %v798 = vadd.f32 0.0, %v797
  %799 = vmatprep.mubr.f32.mxu0 0.0
  %800 = vmatmul.mubr.f32.gmra.mrb[0].mxu0 %v596
  %v801 = vpop.f32.mrb[0].mxu0
  %v802 = vadd.f32 0.0, %v801
  %v803 = vpop.f32.mrb[0].mxu0
  %v804 = vadd.f32 0.0, %v803
  %805 = vmatprep.mubr.f32.mxu0 0.0
  %806 = vmatmul.mubr.f32.gmra.mrb[0].mxu0 %v597
  %v807 = vpop.f32.mrb[0].mxu0
  %v808 = vadd.f32 0.0, %v807
  %v809 = vpop.f32.mrb[0].mxu0
  %v810 = vadd.f32 0.0, %v809
  %811 = vmatprep.mubr.f32.mxu0 0.0
  %812 = vmatmul.mubr.f32.gmra.mrb[0].mxu0 %v598
  %v813 = vpop.f32.mrb[0].mxu0
  %v814 = vadd.f32 0.0, %v813
  %v815 = vpop.f32.mrb[0].mxu0
  %v816 = vadd.f32 0.0, %v815
  %817 = vmatprep.mubr.f32.mxu0 0.0
  %818 = vmatmul.mubr.f32.gmra.mrb[0].mxu0 %v599
  %v819 = vpop.f32.mrb[0].mxu0
  %v820 = vadd.f32 0.0, %v819
  %v821 = vpop.f32.mrb[0].mxu0
  %v822 = vadd.f32 0.0, %v821
  %823 = vmatprep.mubr.f32.mxu0 0.0
  %824 = vmatmul.mubr.f32.gmra.mrb[0].mxu0 %v600
  %v825 = vpop.f32.mrb[0].mxu0
  %v826 = vadd.f32 0.0, %v825
  %v827 = vpop.f32.mrb[0].mxu0
  %v828 = vadd.f32 0.0, %v827
  %829 = vmatprep.mubr.f32.mxu0 0.0
  %830 = vmatmul.mubr.f32.gmra.mrb[0].mxu0 %v601
  %v831 = vpop.f32.mrb[0].mxu0
  %v832 = vadd.f32 0.0, %v831
  %v833 = vpop.f32.mrb[0].mxu0
  %v834 = vadd.f32 0.0, %v833
  %835 = vmatprep.mubr.f32.mxu0 0.0
  %836 = vmatmul.mubr.f32.gmra.mrb[0].mxu0 %v602
  %v837 = vpop.f32.mrb[0].mxu0
  %v838 = vadd.f32 0.0, %v837
  %v839 = vpop.f32.mrb[0].mxu0
  %v840 = vadd.f32 0.0, %v839
  %841 = vmatprep.mubr.f32.mxu0 0.0
  %842 = vmatmul.mubr.f32.gmra.mrb[0].mxu0 %v603
  %v843 = vpop.f32.mrb[0].mxu0
  %v844 = vadd.f32 0.0, %v843
  %v845 = vpop.f32.mrb[0].mxu0
  %v846 = vadd.f32 0.0, %v845
  %847 = vmatprep.mubr.f32.mxu0 0.0
  %848 = vmatmul.mubr.f32.gmra.mrb[0].mxu0 %v604
  %v849 = vpop.f32.mrb[0].mxu0
  %v850 = vadd.f32 0.0, %v849
  %v851 = vpop.f32.mrb[0].mxu0
  %v852 = vadd.f32 0.0, %v851
  %853 = vmatprep.mubr.f32.mxu0 0.0
  %854 = vmatmul.mubr.f32.gmra.mrb[0].mxu0 %v605
  %v855 = vpop.f32.mrb[0].mxu0
  %v856 = vadd.f32 0.0, %v855
  %v857 = vpop.f32.mrb[0].mxu0
  %v858 = vadd.f32 0.0, %v857
  %859 = vmatprep.mubr.f32.mxu0 0.0
  %860 = vmatmul.mubr.f32.gmra.mrb[0].mxu0 %v606
  %v861 = vpop.f32.mrb[0].mxu0
  %v862 = vadd.f32 0.0, %v861
  %v863 = vpop.f32.mrb[0].mxu0
  %v864 = vadd.f32 0.0, %v863
  %865 = vmatprep.mubr.f32.mxu0 0.0
  %866 = vmatmul.mubr.f32.gmra.mrb[0].mxu0 %v607
  %v867 = vpop.f32.mrb[0].mxu0
  %v868 = vadd.f32 0.0, %v867
  %v869 = vpop.f32.mrb[0].mxu0
  %v870 = vadd.f32 0.0, %v869
  %871 = vmatprep.mubr.f32.mxu0 0.0
  %872 = vmatmul.mubr.f32.gmra.mrb[0].mxu0 %v608
  %v873 = vpop.f32.mrb[0].mxu0
  %v874 = vadd.f32 0.0, %v873
  %v875 = vpop.f32.mrb[0].mxu0
  %v876 = vadd.f32 0.0, %v875
  %877 = vmatprep.mubr.f32.mxu0 0.0
  %878 = vmatmul.mubr.f32.gmra.mrb[0].mxu0 %v609
  %v879 = vpop.f32.mrb[0].mxu0
  %v880 = vadd.f32 0.0, %v879
  %v881 = vpop.f32.mrb[0].mxu0
  %v882 = vadd.f32 0.0, %v881
  %883 = vmatprep.mubr.f32.mxu0 0.0
  %884 = vmatmul.mubr.f32.gmra.mrb[0].mxu0 %v610
  %v885 = vpop.f32.mrb[0].mxu0
  %v886 = vadd.f32 0.0, %v885
  %v887 = vpop.f32.mrb[0].mxu0
  %v888 = vadd.f32 0.0, %v887
  %889 = vmatprep.mubr.f32.mxu0 0.0
  %890 = vmatmul.mubr.f32.gmra.mrb[0].mxu0 %v611
  %v891 = vpop.f32.mrb[0].mxu0
  %v892 = vadd.f32 0.0, %v891
  %v893 = vpop.f32.mrb[0].mxu0
  %v894 = vadd.f32 0.0, %v893
  %895 = vmatprep.mubr.f32.mxu0 0.0
  %896 = vmatmul.mubr.f32.gmra.mrb[0].mxu0 %v612
  %v897 = vpop.f32.mrb[0].mxu0
  %v898 = vadd.f32 0.0, %v897
  %v899 = vpop.f32.mrb[0].mxu0
  %v900 = vadd.f32 0.0, %v899
  %901 = vmatprep.mubr.f32.mxu0 0.0
  %902 = vmatmul.mubr.f32.gmra.mrb[0].mxu0 %v613
  %v903 = vpop.f32.mrb[0].mxu0
  %v904 = vadd.f32 0.0, %v903
  %v905 = vpop.f32.mrb[0].mxu0
  %v906 = vadd.f32 0.0, %v905
  %907 = vmatprep.mubr.f32.mxu0 0.0
  %908 = vmatmul.mubr.f32.gmra.mrb[0].mxu0 %v614
  %v909 = vpop.f32.mrb[0].mxu0
  %v910 = vadd.f32 0.0, %v909
  %v911 = vpop.f32.mrb[0].mxu0
  %v912 = vadd.f32 0.0, %v911
  %913 = vmatprep.mubr.f32.mxu0 0.0
  %914 = vmatmul.mubr.f32.gmra.mrb[0].mxu0 %v615
  %v915 = vpop.f32.mrb[0].mxu0
  %v916 = vadd.f32 0.0, %v915
  %v917 = vpop.f32.mrb[0].mxu0
  %v918 = vadd.f32 0.0, %v917
  %919 = vmatprep.mubr.f32.mxu0 0.0
  %920 = vmatmul.mubr.f32.gmra.mrb[0].mxu0 %v616
  %v921 = vpop.f32.mrb[0].mxu0
  %v922 = vadd.f32 0.0, %v921
  %v923 = vpop.f32.mrb[0].mxu0
  %v924 = vadd.f32 0.0, %v923
  %925 = vmatprep.mubr.f32.mxu0 0.0
  %926 = vmatmul.mubr.f32.gmra.mrb[0].mxu0 %v617
  %v927 = vpop.f32.mrb[0].mxu0
  %v928 = vadd.f32 0.0, %v927
  %v929 = vpop.f32.mrb[0].mxu0
  %v930 = vadd.f32 0.0, %v929
  %931 = vmatprep.mubr.f32.mxu0 0.0
  %932 = vmatmul.mubr.f32.gmra.mrb[0].mxu0 %v618
  %v933 = vpop.f32.mrb[0].mxu0
  %v934 = vadd.f32 0.0, %v933
  %v935 = vpop.f32.mrb[0].mxu0
  %v936 = vadd.f32 0.0, %v935
  %937 = vmatprep.mubr.f32.mxu0 0.0
  %938 = vmatmul.mubr.f32.gmra.mrb[0].mxu0 %v619
  %v939 = vpop.f32.mrb[0].mxu0
  %v940 = vadd.f32 0.0, %v939
  %v941 = vpop.f32.mrb[0].mxu0
  %v942 = vadd.f32 0.0, %v941
  %943 = vmatprep.mubr.f32.mxu0 0.0
  %944 = vmatmul.mubr.f32.gmra.mrb[0].mxu0 %v620
  %v945 = vpop.f32.mrb[0].mxu0
  %v946 = vadd.f32 0.0, %v945
  %v947 = vpop.f32.mrb[0].mxu0
  %v948 = vadd.f32 0.0, %v947
  %949 = vmatprep.mubr.f32.mxu0 0.0
  %950 = vmatmul.mubr.f32.gmra.mrb[0].mxu0 %v621
  %v951 = vpop.f32.mrb[0].mxu0
  %v952 = vadd.f32 0.0, %v951
  %v953 = vpop.f32.mrb[0].mxu0
  %v954 = vadd.f32 0.0, %v953
  %955 = vmatprep.mubr.f32.mxu0 0.0
  %956 = vmatmul.mubr.f32.gmra.mrb[0].mxu0 %v622
  %v957 = vpop.f32.mrb[0].mxu0
  %v958 = vadd.f32 0.0, %v957
  %v959 = vpop.f32.mrb[0].mxu0
  %v960 = vadd.f32 0.0, %v959
  %961 = vmatprep.mubr.f32.mxu0 0.0
  %962 = vmatmul.mubr.f32.gmra.mrb[0].mxu0 %v623
  %v963 = vpop.f32.mrb[0].mxu0
  %v964 = vadd.f32 0.0, %v963
  %v965 = vpop.f32.mrb[0].mxu0
  %v966 = vadd.f32 0.0, %v965
  %967 = vmatprep.mubr.f32.mxu0 0.0
  %968 = vmatmul.mubr.f32.gmra.mrb[0].mxu0 %v624
  %v969 = vpop.f32.mrb[0].mxu0
  %v970 = vadd.f32 0.0, %v969
  %v971 = vpop.f32.mrb[0].mxu0
  %v972 = vadd.f32 0.0, %v971
  %973 = vmatprep.mubr.f32.mxu0 0.0
  %974 = vmatmul.mubr.f32.gmra.mrb[0].mxu0 %v625
  %v975 = vpop.f32.mrb[0].mxu0
  %v976 = vadd.f32 0.0, %v975
  %v977 = vpop.f32.mrb[0].mxu0
  %v978 = vadd.f32 0.0, %v977
  %979 = vmatprep.mubr.f32.mxu0 0.0
  %980 = vmatmul.mubr.f32.gmra.mrb[0].mxu0 %v626
  %v981 = vpop.f32.mrb[0].mxu0
  %v982 = vadd.f32 0.0, %v981
  %v983 = vpop.f32.mrb[0].mxu0
  %v984 = vadd.f32 0.0, %v983
  %985 = vmatprep.mubr.f32.mxu0 0.0
  %986 = vmatmul.mubr.f32.gmra.mrb[0].mxu0 %v627
  %v987 = vpop.f32.mrb[0].mxu0
  %v988 = vadd.f32 0.0, %v987
  %v989 = vpop.f32.mrb[0].mxu0
  %v990 = vadd.f32 0.0, %v989
  %991 = vmatprep.mubr.f32.mxu0 0.0
  %992 = vmatmul.mubr.f32.gmra.mrb[0].mxu0 %v628
  %v993 = vpop.f32.mrb[0].mxu0
  %v994 = vadd.f32 0.0, %v993
  %v995 = vpop.f32.mrb[0].mxu0
  %v996 = vadd.f32 0.0, %v995
  %997 = vmatprep.mubr.f32.mxu0 0.0
  %998 = vmatmul.mubr.f32.gmra.mrb[0].mxu0 %v629
  %v999 = vpop.f32.mrb[0].mxu0
  %v1000 = vadd.f32 0.0, %v999
  %v1001 = vpop.f32.mrb[0].mxu0
  %v1002 = vadd.f32 0.0, %v1001
  %1003 = vmatprep.mubr.f32.mxu0 0.0
  %1004 = vmatmul.mubr.f32.gmra.mrb[0].mxu0 %v630
  %v1005 = vpop.f32.mrb[0].mxu0
  %v1006 = vadd.f32 0.0, %v1005
  %v1007 = vpop.f32.mrb[0].mxu0
  %v1008 = vadd.f32 0.0, %v1007
  %1009 = vmatprep.mubr.f32.mxu0 0.0
  %1010 = vmatmul.mubr.f32.gmra.mrb[0].mxu0 %v631
  %v1011 = vpop.f32.mrb[0].mxu0
  %v1012 = vadd.f32 0.0, %v1011
  %v1013 = vpop.f32.mrb[0].mxu0
  %v1014 = vadd.f32 0.0, %v1013
  %1015 = vmatprep.mubr.f32.mxu0 0.0
  %1016 = vmatmul.mubr.f32.gmra.mrb[0].mxu0 %v632
  %v1017 = vpop.f32.mrb[0].mxu0
  %v1018 = vadd.f32 0.0, %v1017
  %v1019 = vpop.f32.mrb[0].mxu0
  %v1020 = vadd.f32 0.0, %v1019
  %1021 = vmatprep.mubr.f32.mxu0 0.0
  %1022 = vmatmul.mubr.f32.gmra.mrb[0].mxu0 %v633
  %v1023 = vpop.f32.mrb[0].mxu0
  %v1024 = vadd.f32 0.0, %v1023
  %v1025 = vpop.f32.mrb[0].mxu0
  %v1026 = vadd.f32 0.0, %v1025
  %1027 = vmatprep.mubr.f32.mxu0 0.0
  %1028 = vmatmul.mubr.f32.gmra.mrb[0].mxu0 %v634
  %v1029 = vpop.f32.mrb[0].mxu0
  %v1030 = vadd.f32 0.0, %v1029
  %v1031 = vpop.f32.mrb[0].mxu0
  %v1032 = vadd.f32 0.0, %v1031
  %1033 = vmatprep.mubr.f32.mxu0 0.0
  %1034 = vmatmul.mubr.f32.gmra.mrb[0].mxu0 %v635
  %v1035 = vpop.f32.mrb[0].mxu0
  %v1036 = vadd.f32 0.0, %v1035
  %v1037 = vpop.f32.mrb[0].mxu0
  %v1038 = vadd.f32 0.0, %v1037
  %1039 = vmatprep.mubr.f32.mxu0 0.0
  %1040 = vmatmul.mubr.f32.gmra.mrb[0].mxu0 %v636
  %v1041 = vpop.f32.mrb[0].mxu0
  %v1042 = vadd.f32 0.0, %v1041
  %v1043 = vpop.f32.mrb[0].mxu0
  %v1044 = vadd.f32 0.0, %v1043
  %1045 = vmatprep.mubr.f32.mxu0 0.0
  %1046 = vmatmul.mubr.f32.gmra.mrb[0].mxu0 %v637
  %v1047 = vpop.f32.mrb[0].mxu0
  %v1048 = vadd.f32 0.0, %v1047
  %v1049 = vpop.f32.mrb[0].mxu0
  %v1050 = vadd.f32 0.0, %v1049
  %1051 = vmatprep.mubr.f32.mxu0 0.0
  %1052 = vmatmul.mubr.f32.gmra.mrb[0].mxu0 %v638
  %v1053 = vpop.f32.mrb[0].mxu0
  %v1054 = vadd.f32 0.0, %v1053
  %v1055 = vpop.f32.mrb[0].mxu0
  %v1056 = vadd.f32 0.0, %v1055
  %1057 = vmatprep.mubr.f32.mxu0 0.0
  %1058 = vmatmul.mubr.f32.gmra.mrb[0].mxu0 %v639
  %v1059 = vpop.f32.mrb[0].mxu0
  %v1060 = vadd.f32 0.0, %v1059
  %v1061 = vpop.f32.mrb[0].mxu0
  %v1062 = vadd.f32 0.0, %v1061
  %1063 = vmatprep.mubr.f32.mxu0 0.0
  %1064 = vmatmul.mubr.f32.gmra.mrb[0].mxu0 %v640
  %v1065 = vpop.f32.mrb[0].mxu0
  %v1066 = vadd.f32 0.0, %v1065
  %v1067 = vpop.f32.mrb[0].mxu0
  %v1068 = vadd.f32 0.0, %v1067
  %1069 = vmatprep.mubr.f32.mxu0 0.0
  %1070 = vmatmul.mubr.f32.gmra.mrb[0].mxu0 %v641
  %v1071 = vpop.f32.mrb[0].mxu0
  %v1072 = vadd.f32 0.0, %v1071
  %v1073 = vpop.f32.mrb[0].mxu0
  %v1074 = vadd.f32 0.0, %v1073
  %1075 = vmatprep.mubr.f32.mxu0 0.0
  %1076 = vmatmul.mubr.f32.gmra.mrb[0].mxu0 %v642
  %v1077 = vpop.f32.mrb[0].mxu0
  %v1078 = vadd.f32 0.0, %v1077
  %v1079 = vpop.f32.mrb[0].mxu0
  %v1080 = vadd.f32 0.0, %v1079
  %1081 = vmatprep.mubr.f32.mxu0 0.0
  %1082 = vmatmul.mubr.f32.gmra.mrb[0].mxu0 %v643
  %v1083 = vpop.f32.mrb[0].mxu0
  %v1084 = vadd.f32 0.0, %v1083
  %v1085 = vpop.f32.mrb[0].mxu0
  %v1086 = vadd.f32 0.0, %v1085
  %1087 = vmatprep.mubr.f32.mxu0 0.0
  %1088 = vmatmul.mubr.f32.gmra.mrb[0].mxu0 %v644
  %v1089 = vpop.f32.mrb[0].mxu0
  %v1090 = vadd.f32 0.0, %v1089
  %v1091 = vpop.f32.mrb[0].mxu0
  %v1092 = vadd.f32 0.0, %v1091
  %1093 = vdwg.mxu0
  %1094 = vst [vmem:[%s5] sm:$0xff] %v712
  %1095 = vst.msk [vmem:[%s5 + $0x8] sm:$0xff] %vm52, %v714
  %1096 = vst [vmem:[%s5 + $0x10] sm:$0xff] %v718
  %1097 = vst.msk [vmem:[%s5 + $0x18] sm:$0xff] %vm52, %v720
  %1098 = vst [vmem:[%s5 + $0x20] sm:$0xff] %v724
  %1099 = vst.msk [vmem:[%s5 + $0x28] sm:$0xff] %vm52, %v726
  %1100 = vst [vmem:[%s5 + $0x30] sm:$0xff] %v730
  %1101 = vst.msk [vmem:[%s5 + $0x38] sm:$0xff] %vm52, %v732
  %1102 = vst [vmem:[%s5 + $0x40] sm:$0xff] %v736
  %1103 = vst.msk [vmem:[%s5 + $0x48] sm:$0xff] %vm52, %v738
  %1104 = vst [vmem:[%s5 + $0x50] sm:$0xff] %v742
  %1105 = vst.msk [vmem:[%s5 + $0x58] sm:$0xff] %vm52, %v744
  %1106 = vst [vmem:[%s5 + $0x60] sm:$0xff] %v748
  %1107 = vst.msk [vmem:[%s5 + $0x68] sm:$0xff] %vm52, %v750
  %1108 = vst [vmem:[%s5 + $0x70] sm:$0xff] %v754
  %1109 = vst.msk [vmem:[%s5 + $0x78] sm:$0xff] %vm52, %v756
  %1110 = vst [vmem:[%s5 + $0x80] sm:$0xff] %v760
  %1111 = vst.msk [vmem:[%s5 + $0x88] sm:$0xff] %vm52, %v762
  %1112 = vst [vmem:[%s5 + $0x90] sm:$0xff] %v766
  %1113 = vst.msk [vmem:[%s5 + $0x98] sm:$0xff] %vm52, %v768
  %1114 = vst [vmem:[%s5 + $0xa0] sm:$0xff] %v772
  %1115 = vst.msk [vmem:[%s5 + $0xa8] sm:$0xff] %vm52, %v774
  %1116 = vst [vmem:[%s5 + $0xb0] sm:$0xff] %v778
  %1117 = vst.msk [vmem:[%s5 + $0xb8] sm:$0xff] %vm52, %v780
  %1118 = vst [vmem:[%s5 + $0xc0] sm:$0xff] %v784
  %1119 = vst.msk [vmem:[%s5 + $0xc8] sm:$0xff] %vm52, %v786
  %1120 = vst [vmem:[%s5 + $0xd0] sm:$0xff] %v790
  %1121 = vst.msk [vmem:[%s5 + $0xd8] sm:$0xff] %vm52, %v792
  %1122 = vst [vmem:[%s5 + $0xe0] sm:$0xff] %v796
  %1123 = vst.msk [vmem:[%s5 + $0xe8] sm:$0xff] %vm52, %v798
  %1124 = vst [vmem:[%s5 + $0xf0] sm:$0xff] %v802
  %1125 = vst.msk [vmem:[%s5 + $0xf8] sm:$0xff] %vm52, %v804
  %1126 = vst [vmem:[%s5 + $0x100] sm:$0xff] %v808
  %1127 = vst.msk [vmem:[%s5 + $0x108] sm:$0xff] %vm52, %v810
  %1128 = vst [vmem:[%s5 + $0x110] sm:$0xff] %v814
  %1129 = vst.msk [vmem:[%s5 + $0x118] sm:$0xff] %vm52, %v816
  %1130 = vst [vmem:[%s5 + $0x120] sm:$0xff] %v820
  %1131 = vst.msk [vmem:[%s5 + $0x128] sm:$0xff] %vm52, %v822
  %1132 = vst [vmem:[%s5 + $0x130] sm:$0xff] %v826
  %1133 = vst.msk [vmem:[%s5 + $0x138] sm:$0xff] %vm52, %v828
  %1134 = vst [vmem:[%s5 + $0x140] sm:$0xff] %v832
  %1135 = vst.msk [vmem:[%s5 + $0x148] sm:$0xff] %vm52, %v834
  %1136 = vst [vmem:[%s5 + $0x150] sm:$0xff] %v838
  %1137 = vst.msk [vmem:[%s5 + $0x158] sm:$0xff] %vm52, %v840
  %1138 = vst [vmem:[%s5 + $0x160] sm:$0xff] %v844
  %1139 = vst.msk [vmem:[%s5 + $0x168] sm:$0xff] %vm52, %v846
  %1140 = vst [vmem:[%s5 + $0x170] sm:$0xff] %v850
  %1141 = vst.msk [vmem:[%s5 + $0x178] sm:$0xff] %vm52, %v852
  %1142 = vst [vmem:[%s5 + $0x180] sm:$0xff] %v856
  %1143 = vst.msk [vmem:[%s5 + $0x188] sm:$0xff] %vm52, %v858
  %1144 = vst [vmem:[%s5 + $0x190] sm:$0xff] %v862
  %1145 = vst.msk [vmem:[%s5 + $0x198] sm:$0xff] %vm52, %v864
  %1146 = vst [vmem:[%s5 + $0x1a0] sm:$0xff] %v868
  %1147 = vst.msk [vmem:[%s5 + $0x1a8] sm:$0xff] %vm52, %v870
  %1148 = vst [vmem:[%s5 + $0x1b0] sm:$0xff] %v874
  %1149 = vst.msk [vmem:[%s5 + $0x1b8] sm:$0xff] %vm52, %v876
  %1150 = vst [vmem:[%s5 + $0x1c0] sm:$0xff] %v880
  %1151 = vst.msk [vmem:[%s5 + $0x1c8] sm:$0xff] %vm52, %v882
  %1152 = vst [vmem:[%s5 + $0x1d0] sm:$0xff] %v886
  %1153 = vst.msk [vmem:[%s5 + $0x1d8] sm:$0xff] %vm52, %v888
  %1154 = vst [vmem:[%s5 + $0x1e0] sm:$0xff] %v892
  %1155 = vst.msk [vmem:[%s5 + $0x1e8] sm:$0xff] %vm52, %v894
  %1156 = vst [vmem:[%s5 + $0x1f0] sm:$0xff] %v898
  %1157 = vst.msk [vmem:[%s5 + $0x1f8] sm:$0xff] %vm52, %v900
  %1158 = vst [vmem:[%s5 + $0x200] sm:$0xff] %v904
  %1159 = vst.msk [vmem:[%s5 + $0x208] sm:$0xff] %vm52, %v906
  %1160 = vst [vmem:[%s5 + $0x210] sm:$0xff] %v910
  %1161 = vst.msk [vmem:[%s5 + $0x218] sm:$0xff] %vm52, %v912
  %1162 = vst [vmem:[%s5 + $0x220] sm:$0xff] %v916
  %1163 = vst.msk [vmem:[%s5 + $0x228] sm:$0xff] %vm52, %v918
  %1164 = vst [vmem:[%s5 + $0x230] sm:$0xff] %v922
  %1165 = vst.msk [vmem:[%s5 + $0x238] sm:$0xff] %vm52, %v924
  %1166 = vst [vmem:[%s5 + $0x240] sm:$0xff] %v928
  %1167 = vst.msk [vmem:[%s5 + $0x248] sm:$0xff] %vm52, %v930
  %1168 = vst [vmem:[%s5 + $0x250] sm:$0xff] %v934
  %1169 = vst.msk [vmem:[%s5 + $0x258] sm:$0xff] %vm52, %v936
  %1170 = vst [vmem:[%s5 + $0x260] sm:$0xff] %v940
  %1171 = vst.msk [vmem:[%s5 + $0x268] sm:$0xff] %vm52, %v942
  %1172 = vst [vmem:[%s5 + $0x270] sm:$0xff] %v946
  %1173 = vst.msk [vmem:[%s5 + $0x278] sm:$0xff] %vm52, %v948
  %1174 = vst [vmem:[%s5 + $0x280] sm:$0xff] %v952
  %1175 = vst.msk [vmem:[%s5 + $0x288] sm:$0xff] %vm52, %v954
  %1176 = vst [vmem:[%s5 + $0x290] sm:$0xff] %v958
  %1177 = vst.msk [vmem:[%s5 + $0x298] sm:$0xff] %vm52, %v960
  %1178 = vst [vmem:[%s5 + $0x2a0] sm:$0xff] %v964
  %1179 = vst.msk [vmem:[%s5 + $0x2a8] sm:$0xff] %vm52, %v966
  %1180 = vst [vmem:[%s5 + $0x2b0] sm:$0xff] %v970
  %1181 = vst.msk [vmem:[%s5 + $0x2b8] sm:$0xff] %vm52, %v972
  %1182 = vst [vmem:[%s5 + $0x2c0] sm:$0xff] %v976
  %1183 = vst.msk [vmem:[%s5 + $0x2c8] sm:$0xff] %vm52, %v978
  %1184 = vst [vmem:[%s5 + $0x2d0] sm:$0xff] %v982
  %1185 = vst.msk [vmem:[%s5 + $0x2d8] sm:$0xff] %vm52, %v984
  %1186 = vst [vmem:[%s5 + $0x2e0] sm:$0xff] %v988
  %1187 = vst.msk [vmem:[%s5 + $0x2e8] sm:$0xff] %vm52, %v990
  %1188 = vst [vmem:[%s5 + $0x2f0] sm:$0xff] %v994
  %1189 = vst.msk [vmem:[%s5 + $0x2f8] sm:$0xff] %vm52, %v996
  %1190 = vst [vmem:[%s5 + $0x300] sm:$0xff] %v1000
  %1191 = vst.msk [vmem:[%s5 + $0x308] sm:$0xff] %vm52, %v1002
  %1192 = vst [vmem:[%s5 + $0x310] sm:$0xff] %v1006
  %1193 = vst.msk [vmem:[%s5 + $0x318] sm:$0xff] %vm52, %v1008
  %1194 = vst [vmem:[%s5 + $0x320] sm:$0xff] %v1012
  %1195 = vst.msk [vmem:[%s5 + $0x328] sm:$0xff] %vm52, %v1014
  %1196 = vst [vmem:[%s5 + $0x330] sm:$0xff] %v1018
  %1197 = vst.msk [vmem:[%s5 + $0x338] sm:$0xff] %vm52, %v1020
  %1198 = vst [vmem:[%s5 + $0x340] sm:$0xff] %v1024
  %1199 = vst.msk [vmem:[%s5 + $0x348] sm:$0xff] %vm52, %v1026
  %1200 = vst [vmem:[%s5 + $0x350] sm:$0xff] %v1030
  %1201 = vst.msk [vmem:[%s5 + $0x358] sm:$0xff] %vm52, %v1032
  %1202 = vst [vmem:[%s5 + $0x360] sm:$0xff] %v1036
  %1203 = vst.msk [vmem:[%s5 + $0x368] sm:$0xff] %vm52, %v1038
  %1204 = vst [vmem:[%s5 + $0x370] sm:$0xff] %v1042
  %1205 = vst.msk [vmem:[%s5 + $0x378] sm:$0xff] %vm52, %v1044
  %1206 = vst [vmem:[%s5 + $0x380] sm:$0xff] %v1048
  %1207 = vst.msk [vmem:[%s5 + $0x388] sm:$0xff] %vm52, %v1050
  %1208 = vst [vmem:[%s5 + $0x390] sm:$0xff] %v1054
  %1209 = vst.msk [vmem:[%s5 + $0x398] sm:$0xff] %vm52, %v1056
  %1210 = vst [vmem:[%s5 + $0x3a0] sm:$0xff] %v1060
  %1211 = vst.msk [vmem:[%s5 + $0x3a8] sm:$0xff] %vm52, %v1062
  %1212 = vst [vmem:[%s5 + $0x3b0] sm:$0xff] %v1066
  %1213 = vst.msk [vmem:[%s5 + $0x3b8] sm:$0xff] %vm52, %v1068
  %1214 = vst [vmem:[%s5 + $0x3c0] sm:$0xff] %v1072
  %1215 = vst.msk [vmem:[%s5 + $0x3c8] sm:$0xff] %vm52, %v1074
  %1216 = vst [vmem:[%s5 + $0x3d0] sm:$0xff] %v1078
  %1217 = vst.msk [vmem:[%s5 + $0x3d8] sm:$0xff] %vm52, %v1080
  %1218 = vst [vmem:[%s5 + $0x3e0] sm:$0xff] %v1084
  %1219 = vst.msk [vmem:[%s5 + $0x3e8] sm:$0xff] %vm52, %v1086
  %1220 = vst [vmem:[%s5 + $0x3f0] sm:$0xff] %v1090
  %1221 = vst.msk [vmem:[%s5 + $0x3f8] sm:$0xff] %vm52, %v1092
  %v1222 = vld [vmem:[%s5] sm:$0xff]
  %v1223 = vld [vmem:[%s5 + $0x8] sm:$0xff]
  %v1224 = vld [vmem:[%s5 + $0x10] sm:$0xff]
  %v1225 = vld [vmem:[%s5 + $0x18] sm:$0xff]
  %v1226 = vld [vmem:[%s5 + $0x20] sm:$0xff]
  %v1227 = vld [vmem:[%s5 + $0x28] sm:$0xff]
  %v1228 = vld [vmem:[%s5 + $0x30] sm:$0xff]
  %v1229 = vld [vmem:[%s5 + $0x38] sm:$0xff]
  %v1230 = vld [vmem:[%s5 + $0x40] sm:$0xff]
  %v1231 = vld [vmem:[%s5 + $0x48] sm:$0xff]
  %v1232 = vld [vmem:[%s5 + $0x50] sm:$0xff]
  %v1233 = vld [vmem:[%s5 + $0x58] sm:$0xff]
  %v1234 = vld [vmem:[%s5 + $0x60] sm:$0xff]
  %v1235 = vld [vmem:[%s5 + $0x68] sm:$0xff]
  %v1236 = vld [vmem:[%s5 + $0x70] sm:$0xff]
  %v1237 = vld [vmem:[%s5 + $0x78] sm:$0xff]
  %v1238 = vld [vmem:[%s5 + $0x80] sm:$0xff]
  %v1239 = vld [vmem:[%s5 + $0x88] sm:$0xff]
  %v1240 = vld [vmem:[%s5 + $0x90] sm:$0xff]
  %v1241 = vld [vmem:[%s5 + $0x98] sm:$0xff]
  %v1242 = vld [vmem:[%s5 + $0xa0] sm:$0xff]
  %v1243 = vld [vmem:[%s5 + $0xa8] sm:$0xff]
  %v1244 = vld [vmem:[%s5 + $0xb0] sm:$0xff]
  %v1245 = vld [vmem:[%s5 + $0xb8] sm:$0xff]
  %v1246 = vld [vmem:[%s5 + $0xc0] sm:$0xff]
  %v1247 = vld [vmem:[%s5 + $0xc8] sm:$0xff]
  %v1248 = vld [vmem:[%s5 + $0xd0] sm:$0xff]
  %v1249 = vld [vmem:[%s5 + $0xd8] sm:$0xff]
  %v1250 = vld [vmem:[%s5 + $0xe0] sm:$0xff]
  %v1251 = vld [vmem:[%s5 + $0xe8] sm:$0xff]
  %v1252 = vld [vmem:[%s5 + $0xf0] sm:$0xff]
  %v1253 = vld [vmem:[%s5 + $0xf8] sm:$0xff]
  %v1254 = vld [vmem:[%s5 + $0x100] sm:$0xff]
  %v1255 = vld [vmem:[%s5 + $0x108] sm:$0xff]
  %v1256 = vld [vmem:[%s5 + $0x110] sm:$0xff]
  %v1257 = vld [vmem:[%s5 + $0x118] sm:$0xff]
  %v1258 = vld [vmem:[%s5 + $0x120] sm:$0xff]
  %v1259 = vld [vmem:[%s5 + $0x128] sm:$0xff]
  %v1260 = vld [vmem:[%s5 + $0x130] sm:$0xff]
  %v1261 = vld [vmem:[%s5 + $0x138] sm:$0xff]
  %v1262 = vld [vmem:[%s5 + $0x140] sm:$0xff]
  %v1263 = vld [vmem:[%s5 + $0x148] sm:$0xff]
  %v1264 = vld [vmem:[%s5 + $0x150] sm:$0xff]
  %v1265 = vld [vmem:[%s5 + $0x158] sm:$0xff]
  %v1266 = vld [vmem:[%s5 + $0x160] sm:$0xff]
  %v1267 = vld [vmem:[%s5 + $0x168] sm:$0xff]
  %v1268 = vld [vmem:[%s5 + $0x170] sm:$0xff]
  %v1269 = vld [vmem:[%s5 + $0x178] sm:$0xff]
  %v1270 = vld [vmem:[%s5 + $0x180] sm:$0xff]
  %v1271 = vld [vmem:[%s5 + $0x188] sm:$0xff]
  %v1272 = vld [vmem:[%s5 + $0x190] sm:$0xff]
  %v1273 = vld [vmem:[%s5 + $0x198] sm:$0xff]
  %v1274 = vld [vmem:[%s5 + $0x1a0] sm:$0xff]
  %v1275 = vld [vmem:[%s5 + $0x1a8] sm:$0xff]
  %v1276 = vld [vmem:[%s5 + $0x1b0] sm:$0xff]
  %v1277 = vld [vmem:[%s5 + $0x1b8] sm:$0xff]
  %v1278 = vld [vmem:[%s5 + $0x1c0] sm:$0xff]
  %v1279 = vld [vmem:[%s5 + $0x1c8] sm:$0xff]
  %v1280 = vld [vmem:[%s5 + $0x1d0] sm:$0xff]
  %v1281 = vld [vmem:[%s5 + $0x1d8] sm:$0xff]
  %v1282 = vld [vmem:[%s5 + $0x1e0] sm:$0xff]
  %v1283 = vld [vmem:[%s5 + $0x1e8] sm:$0xff]
  %v1284 = vld [vmem:[%s5 + $0x1f0] sm:$0xff]
  %v1285 = vld [vmem:[%s5 + $0x1f8] sm:$0xff]
  %v1286 = vld [vmem:[%s5 + $0x200] sm:$0xff]
  %v1287 = vld [vmem:[%s5 + $0x208] sm:$0xff]
  %v1288 = vld [vmem:[%s5 + $0x210] sm:$0xff]
  %v1289 = vld [vmem:[%s5 + $0x218] sm:$0xff]
  %v1290 = vld [vmem:[%s5 + $0x220] sm:$0xff]
  %v1291 = vld [vmem:[%s5 + $0x228] sm:$0xff]
  %v1292 = vld [vmem:[%s5 + $0x230] sm:$0xff]
  %v1293 = vld [vmem:[%s5 + $0x238] sm:$0xff]
  %v1294 = vld [vmem:[%s5 + $0x240] sm:$0xff]
  %v1295 = vld [vmem:[%s5 + $0x248] sm:$0xff]
  %v1296 = vld [vmem:[%s5 + $0x250] sm:$0xff]
  %v1297 = vld [vmem:[%s5 + $0x258] sm:$0xff]
  %v1298 = vld [vmem:[%s5 + $0x260] sm:$0xff]
  %v1299 = vld [vmem:[%s5 + $0x268] sm:$0xff]
  %v1300 = vld [vmem:[%s5 + $0x270] sm:$0xff]
  %v1301 = vld [vmem:[%s5 + $0x278] sm:$0xff]
  %v1302 = vld [vmem:[%s5 + $0x280] sm:$0xff]
  %v1303 = vld [vmem:[%s5 + $0x288] sm:$0xff]
  %v1304 = vld [vmem:[%s5 + $0x290] sm:$0xff]
  %v1305 = vld [vmem:[%s5 + $0x298] sm:$0xff]
  %v1306 = vld [vmem:[%s5 + $0x2a0] sm:$0xff]
  %v1307 = vld [vmem:[%s5 + $0x2a8] sm:$0xff]
  %v1308 = vld [vmem:[%s5 + $0x2b0] sm:$0xff]
  %v1309 = vld [vmem:[%s5 + $0x2b8] sm:$0xff]
  %v1310 = vld [vmem:[%s5 + $0x2c0] sm:$0xff]
  %v1311 = vld [vmem:[%s5 + $0x2c8] sm:$0xff]
  %v1312 = vld [vmem:[%s5 + $0x2d0] sm:$0xff]
  %v1313 = vld [vmem:[%s5 + $0x2d8] sm:$0xff]
  %v1314 = vld [vmem:[%s5 + $0x2e0] sm:$0xff]
  %v1315 = vld [vmem:[%s5 + $0x2e8] sm:$0xff]
  %v1316 = vld [vmem:[%s5 + $0x2f0] sm:$0xff]
  %v1317 = vld [vmem:[%s5 + $0x2f8] sm:$0xff]
  %v1318 = vld [vmem:[%s5 + $0x300] sm:$0xff]
  %v1319 = vld [vmem:[%s5 + $0x308] sm:$0xff]
  %v1320 = vld [vmem:[%s5 + $0x310] sm:$0xff]
  %v1321 = vld [vmem:[%s5 + $0x318] sm:$0xff]
  %v1322 = vld [vmem:[%s5 + $0x320] sm:$0xff]
  %v1323 = vld [vmem:[%s5 + $0x328] sm:$0xff]
  %v1324 = vld [vmem:[%s5 + $0x330] sm:$0xff]
  %v1325 = vld [vmem:[%s5 + $0x338] sm:$0xff]
  %v1326 = vld [vmem:[%s5 + $0x340] sm:$0xff]
  %v1327 = vld [vmem:[%s5 + $0x348] sm:$0xff]
  %v1328 = vld [vmem:[%s5 + $0x350] sm:$0xff]
  %v1329 = vld [vmem:[%s5 + $0x358] sm:$0xff]
  %v1330 = vld [vmem:[%s5 + $0x360] sm:$0xff]
  %v1331 = vld [vmem:[%s5 + $0x368] sm:$0xff]
  %v1332 = vld [vmem:[%s5 + $0x370] sm:$0xff]
  %v1333 = vld [vmem:[%s5 + $0x378] sm:$0xff]
  %v1334 = vld [vmem:[%s5 + $0x380] sm:$0xff]
  %v1335 = vld [vmem:[%s5 + $0x388] sm:$0xff]
  %v1336 = vld [vmem:[%s5 + $0x390] sm:$0xff]
  %v1337 = vld [vmem:[%s5 + $0x398] sm:$0xff]
  %v1338 = vld [vmem:[%s5 + $0x3a0] sm:$0xff]
  %v1339 = vld [vmem:[%s5 + $0x3a8] sm:$0xff]
  %v1340 = vld [vmem:[%s5 + $0x3b0] sm:$0xff]
  %v1341 = vld [vmem:[%s5 + $0x3b8] sm:$0xff]
  %v1342 = vld [vmem:[%s5 + $0x3c0] sm:$0xff]
  %v1343 = vld [vmem:[%s5 + $0x3c8] sm:$0xff]
  %v1344 = vld [vmem:[%s5 + $0x3d0] sm:$0xff]
  %v1345 = vld [vmem:[%s5 + $0x3d8] sm:$0xff]
  %v1346 = vld [vmem:[%s5 + $0x3e0] sm:$0xff]
  %v1347 = vld [vmem:[%s5 + $0x3e8] sm:$0xff]
  %v1348 = vld [vmem:[%s5 + $0x3f0] sm:$0xff]
  %v1349 = vld [vmem:[%s5 + $0x3f8] sm:$0xff]
  %v1350 = vmul.f32 %v1222, %v1222
  %v1351 = vmul.f32 %v1223, %v1223
  %v1352 = vmul.f32 %v1224, %v1224
  %v1353 = vmul.f32 %v1225, %v1225
  %v1354 = vmul.f32 %v1226, %v1226
  %v1355 = vmul.f32 %v1227, %v1227
  %v1356 = vmul.f32 %v1228, %v1228
  %v1357 = vmul.f32 %v1229, %v1229
  %v1358 = vmul.f32 %v1230, %v1230
  %v1359 = vmul.f32 %v1231, %v1231
  %v1360 = vmul.f32 %v1232, %v1232
  %v1361 = vmul.f32 %v1233, %v1233
  %v1362 = vmul.f32 %v1234, %v1234
  %v1363 = vmul.f32 %v1235, %v1235
  %v1364 = vmul.f32 %v1236, %v1236
  %v1365 = vmul.f32 %v1237, %v1237
  %v1366 = vmul.f32 %v1238, %v1238
  %v1367 = vmul.f32 %v1239, %v1239
  %v1368 = vmul.f32 %v1240, %v1240
  %v1369 = vmul.f32 %v1241, %v1241
  %v1370 = vmul.f32 %v1242, %v1242
  %v1371 = vmul.f32 %v1243, %v1243
  %v1372 = vmul.f32 %v1244, %v1244
  %v1373 = vmul.f32 %v1245, %v1245
  %v1374 = vmul.f32 %v1246, %v1246
  %v1375 = vmul.f32 %v1247, %v1247
  %v1376 = vmul.f32 %v1248, %v1248
  %v1377 = vmul.f32 %v1249, %v1249
  %v1378 = vmul.f32 %v1250, %v1250
  %v1379 = vmul.f32 %v1251, %v1251
  %v1380 = vmul.f32 %v1252, %v1252
  %v1381 = vmul.f32 %v1253, %v1253
  %v1382 = vmul.f32 %v1254, %v1254
  %v1383 = vmul.f32 %v1255, %v1255
  %v1384 = vmul.f32 %v1256, %v1256
  %v1385 = vmul.f32 %v1257, %v1257
  %v1386 = vmul.f32 %v1258, %v1258
  %v1387 = vmul.f32 %v1259, %v1259
  %v1388 = vmul.f32 %v1260, %v1260
  %v1389 = vmul.f32 %v1261, %v1261
  %v1390 = vmul.f32 %v1262, %v1262
  %v1391 = vmul.f32 %v1263, %v1263
  %v1392 = vmul.f32 %v1264, %v1264
  %v1393 = vmul.f32 %v1265, %v1265
  %v1394 = vmul.f32 %v1266, %v1266
  %v1395 = vmul.f32 %v1267, %v1267
  %v1396 = vmul.f32 %v1268, %v1268
  %v1397 = vmul.f32 %v1269, %v1269
  %v1398 = vmul.f32 %v1270, %v1270
  %v1399 = vmul.f32 %v1271, %v1271
  %v1400 = vmul.f32 %v1272, %v1272
  %v1401 = vmul.f32 %v1273, %v1273
  %v1402 = vmul.f32 %v1274, %v1274
  %v1403 = vmul.f32 %v1275, %v1275
  %v1404 = vmul.f32 %v1276, %v1276
  %v1405 = vmul.f32 %v1277, %v1277
  %v1406 = vmul.f32 %v1278, %v1278
  %v1407 = vmul.f32 %v1279, %v1279
  %v1408 = vmul.f32 %v1280, %v1280
  %v1409 = vmul.f32 %v1281, %v1281
  %v1410 = vmul.f32 %v1282, %v1282
  %v1411 = vmul.f32 %v1283, %v1283
  %v1412 = vmul.f32 %v1284, %v1284
  %v1413 = vmul.f32 %v1285, %v1285
  %v1414 = vmul.f32 %v1286, %v1286
  %v1415 = vmul.f32 %v1287, %v1287
  %v1416 = vmul.f32 %v1288, %v1288
  %v1417 = vmul.f32 %v1289, %v1289
  %v1418 = vmul.f32 %v1290, %v1290
  %v1419 = vmul.f32 %v1291, %v1291
  %v1420 = vmul.f32 %v1292, %v1292
  %v1421 = vmul.f32 %v1293, %v1293
  %v1422 = vmul.f32 %v1294, %v1294
  %v1423 = vmul.f32 %v1295, %v1295
  %v1424 = vmul.f32 %v1296, %v1296
  %v1425 = vmul.f32 %v1297, %v1297
  %v1426 = vmul.f32 %v1298, %v1298
  %v1427 = vmul.f32 %v1299, %v1299
  %v1428 = vmul.f32 %v1300, %v1300
  %v1429 = vmul.f32 %v1301, %v1301
  %v1430 = vmul.f32 %v1302, %v1302
  %v1431 = vmul.f32 %v1303, %v1303
  %v1432 = vmul.f32 %v1304, %v1304
  %v1433 = vmul.f32 %v1305, %v1305
  %v1434 = vmul.f32 %v1306, %v1306
  %v1435 = vmul.f32 %v1307, %v1307
  %v1436 = vmul.f32 %v1308, %v1308
  %v1437 = vmul.f32 %v1309, %v1309
  %v1438 = vmul.f32 %v1310, %v1310
  %v1439 = vmul.f32 %v1311, %v1311
  %v1440 = vmul.f32 %v1312, %v1312
  %v1441 = vmul.f32 %v1313, %v1313
  %v1442 = vmul.f32 %v1314, %v1314
  %v1443 = vmul.f32 %v1315, %v1315
  %v1444 = vmul.f32 %v1316, %v1316
  %v1445 = vmul.f32 %v1317, %v1317
  %v1446 = vmul.f32 %v1318, %v1318
  %v1447 = vmul.f32 %v1319, %v1319
  %v1448 = vmul.f32 %v1320, %v1320
  %v1449 = vmul.f32 %v1321, %v1321
  %v1450 = vmul.f32 %v1322, %v1322
  %v1451 = vmul.f32 %v1323, %v1323
  %v1452 = vmul.f32 %v1324, %v1324
  %v1453 = vmul.f32 %v1325, %v1325
  %v1454 = vmul.f32 %v1326, %v1326
  %v1455 = vmul.f32 %v1327, %v1327
  %v1456 = vmul.f32 %v1328, %v1328
  %v1457 = vmul.f32 %v1329, %v1329
  %v1458 = vmul.f32 %v1330, %v1330
  %v1459 = vmul.f32 %v1331, %v1331
  %v1460 = vmul.f32 %v1332, %v1332
  %v1461 = vmul.f32 %v1333, %v1333
  %v1462 = vmul.f32 %v1334, %v1334
  %v1463 = vmul.f32 %v1335, %v1335
  %v1464 = vmul.f32 %v1336, %v1336
  %v1465 = vmul.f32 %v1337, %v1337
  %v1466 = vmul.f32 %v1338, %v1338
  %v1467 = vmul.f32 %v1339, %v1339
  %v1468 = vmul.f32 %v1340, %v1340
  %v1469 = vmul.f32 %v1341, %v1341
  %v1470 = vmul.f32 %v1342, %v1342
  %v1471 = vmul.f32 %v1343, %v1343
  %v1472 = vmul.f32 %v1344, %v1344
  %v1473 = vmul.f32 %v1345, %v1345
  %v1474 = vmul.f32 %v1346, %v1346
  %v1475 = vmul.f32 %v1347, %v1347
  %v1476 = vmul.f32 %v1348, %v1348
  %v1477 = vmul.f32 %v1349, %v1349
  %v1478 = vsel %vm52, %v1351, 0.0
  %v1479 = vadd.f32 %v1350, %v1478
  %1480 = vadd.xlane.f32.xlu0 %v1479
  %v1481 = vpop.xlane.xlu0 %1480
  %v1482 = vsel %vm52, %v1353, 0.0
  %v1483 = vadd.f32 %v1352, %v1482
  %1484 = vadd.xlane.f32.xlu0 %v1483
  %v1485 = vpop.xlane.xlu0 %1484
  %v1486 = vsel %vm52, %v1355, 0.0
  %v1487 = vadd.f32 %v1354, %v1486
  %1488 = vadd.xlane.f32.xlu0 %v1487
  %v1489 = vpop.xlane.xlu0 %1488
  %v1490 = vsel %vm52, %v1357, 0.0
  %v1491 = vadd.f32 %v1356, %v1490
  %1492 = vadd.xlane.f32.xlu0 %v1491
  %v1493 = vpop.xlane.xlu0 %1492
  %v1494 = vsel %vm52, %v1359, 0.0
  %v1495 = vadd.f32 %v1358, %v1494
  %1496 = vadd.xlane.f32.xlu0 %v1495
  %v1497 = vpop.xlane.xlu0 %1496
  %v1498 = vsel %vm52, %v1361, 0.0
  %v1499 = vadd.f32 %v1360, %v1498
  %1500 = vadd.xlane.f32.xlu0 %v1499
  %v1501 = vpop.xlane.xlu0 %1500
  %v1502 = vsel %vm52, %v1363, 0.0
  %v1503 = vadd.f32 %v1362, %v1502
  %1504 = vadd.xlane.f32.xlu0 %v1503
  %v1505 = vpop.xlane.xlu0 %1504
  %v1506 = vsel %vm52, %v1365, 0.0
  %v1507 = vadd.f32 %v1364, %v1506
  %1508 = vadd.xlane.f32.xlu0 %v1507
  %v1509 = vpop.xlane.xlu0 %1508
  %v1510 = vsel %vm52, %v1367, 0.0
  %v1511 = vadd.f32 %v1366, %v1510
  %1512 = vadd.xlane.f32.xlu0 %v1511
  %v1513 = vpop.xlane.xlu0 %1512
  %v1514 = vsel %vm52, %v1369, 0.0
  %v1515 = vadd.f32 %v1368, %v1514
  %1516 = vadd.xlane.f32.xlu0 %v1515
  %v1517 = vpop.xlane.xlu0 %1516
  %v1518 = vsel %vm52, %v1371, 0.0
  %v1519 = vadd.f32 %v1370, %v1518
  %1520 = vadd.xlane.f32.xlu0 %v1519
  %v1521 = vpop.xlane.xlu0 %1520
  %v1522 = vsel %vm52, %v1373, 0.0
  %v1523 = vadd.f32 %v1372, %v1522
  %1524 = vadd.xlane.f32.xlu0 %v1523
  %v1525 = vpop.xlane.xlu0 %1524
  %v1526 = vsel %vm52, %v1375, 0.0
  %v1527 = vadd.f32 %v1374, %v1526
  %1528 = vadd.xlane.f32.xlu0 %v1527
  %v1529 = vpop.xlane.xlu0 %1528
  %v1530 = vsel %vm52, %v1377, 0.0
  %v1531 = vadd.f32 %v1376, %v1530
  %1532 = vadd.xlane.f32.xlu0 %v1531
  %v1533 = vpop.xlane.xlu0 %1532
  %v1534 = vsel %vm52, %v1379, 0.0
  %v1535 = vadd.f32 %v1378, %v1534
  %1536 = vadd.xlane.f32.xlu0 %v1535
  %v1537 = vpop.xlane.xlu0 %1536
  %v1538 = vsel %vm52, %v1381, 0.0
  %v1539 = vadd.f32 %v1380, %v1538
  %1540 = vadd.xlane.f32.xlu0 %v1539
  %v1541 = vpop.xlane.xlu0 %1540
  %v1542 = vsel %vm52, %v1383, 0.0
  %v1543 = vadd.f32 %v1382, %v1542
  %1544 = vadd.xlane.f32.xlu0 %v1543
  %v1545 = vpop.xlane.xlu0 %1544
  %v1546 = vsel %vm52, %v1385, 0.0
  %v1547 = vadd.f32 %v1384, %v1546
  %1548 = vadd.xlane.f32.xlu0 %v1547
  %v1549 = vpop.xlane.xlu0 %1548
  %v1550 = vsel %vm52, %v1387, 0.0
  %v1551 = vadd.f32 %v1386, %v1550
  %1552 = vadd.xlane.f32.xlu0 %v1551
  %v1553 = vpop.xlane.xlu0 %1552
  %v1554 = vsel %vm52, %v1389, 0.0
  %v1555 = vadd.f32 %v1388, %v1554
  %1556 = vadd.xlane.f32.xlu0 %v1555
  %v1557 = vpop.xlane.xlu0 %1556
  %v1558 = vsel %vm52, %v1391, 0.0
  %v1559 = vadd.f32 %v1390, %v1558
  %1560 = vadd.xlane.f32.xlu0 %v1559
  %v1561 = vpop.xlane.xlu0 %1560
  %v1562 = vsel %vm52, %v1393, 0.0
  %v1563 = vadd.f32 %v1392, %v1562
  %1564 = vadd.xlane.f32.xlu0 %v1563
  %v1565 = vpop.xlane.xlu0 %1564
  %v1566 = vsel %vm52, %v1395, 0.0
  %v1567 = vadd.f32 %v1394, %v1566
  %1568 = vadd.xlane.f32.xlu0 %v1567
  %v1569 = vpop.xlane.xlu0 %1568
  %v1570 = vsel %vm52, %v1397, 0.0
  %v1571 = vadd.f32 %v1396, %v1570
  %1572 = vadd.xlane.f32.xlu0 %v1571
  %v1573 = vpop.xlane.xlu0 %1572
  %v1574 = vsel %vm52, %v1399, 0.0
  %v1575 = vadd.f32 %v1398, %v1574
  %1576 = vadd.xlane.f32.xlu0 %v1575
  %v1577 = vpop.xlane.xlu0 %1576
  %v1578 = vsel %vm52, %v1401, 0.0
  %v1579 = vadd.f32 %v1400, %v1578
  %1580 = vadd.xlane.f32.xlu0 %v1579
  %v1581 = vpop.xlane.xlu0 %1580
  %v1582 = vsel %vm52, %v1403, 0.0
  %v1583 = vadd.f32 %v1402, %v1582
  %1584 = vadd.xlane.f32.xlu0 %v1583
  %v1585 = vpop.xlane.xlu0 %1584
  %v1586 = vsel %vm52, %v1405, 0.0
  %v1587 = vadd.f32 %v1404, %v1586
  %1588 = vadd.xlane.f32.xlu0 %v1587
  %v1589 = vpop.xlane.xlu0 %1588
  %v1590 = vsel %vm52, %v1407, 0.0
  %v1591 = vadd.f32 %v1406, %v1590
  %1592 = vadd.xlane.f32.xlu0 %v1591
  %v1593 = vpop.xlane.xlu0 %1592
  %v1594 = vsel %vm52, %v1409, 0.0
  %v1595 = vadd.f32 %v1408, %v1594
  %1596 = vadd.xlane.f32.xlu0 %v1595
  %v1597 = vpop.xlane.xlu0 %1596
  %v1598 = vsel %vm52, %v1411, 0.0
  %v1599 = vadd.f32 %v1410, %v1598
  %1600 = vadd.xlane.f32.xlu0 %v1599
  %v1601 = vpop.xlane.xlu0 %1600
  %v1602 = vsel %vm52, %v1413, 0.0
  %v1603 = vadd.f32 %v1412, %v1602
  %1604 = vadd.xlane.f32.xlu0 %v1603
  %v1605 = vpop.xlane.xlu0 %1604
  %v1606 = vsel %vm52, %v1415, 0.0
  %v1607 = vadd.f32 %v1414, %v1606
  %1608 = vadd.xlane.f32.xlu0 %v1607
  %v1609 = vpop.xlane.xlu0 %1608
  %v1610 = vsel %vm52, %v1417, 0.0
  %v1611 = vadd.f32 %v1416, %v1610
  %1612 = vadd.xlane.f32.xlu0 %v1611
  %v1613 = vpop.xlane.xlu0 %1612
  %v1614 = vsel %vm52, %v1419, 0.0
  %v1615 = vadd.f32 %v1418, %v1614
  %1616 = vadd.xlane.f32.xlu0 %v1615
  %v1617 = vpop.xlane.xlu0 %1616
  %v1618 = vsel %vm52, %v1421, 0.0
  %v1619 = vadd.f32 %v1420, %v1618
  %1620 = vadd.xlane.f32.xlu0 %v1619
  %v1621 = vpop.xlane.xlu0 %1620
  %v1622 = vsel %vm52, %v1423, 0.0
  %v1623 = vadd.f32 %v1422, %v1622
  %1624 = vadd.xlane.f32.xlu0 %v1623
  %v1625 = vpop.xlane.xlu0 %1624
  %v1626 = vsel %vm52, %v1425, 0.0
  %v1627 = vadd.f32 %v1424, %v1626
  %1628 = vadd.xlane.f32.xlu0 %v1627
  %v1629 = vpop.xlane.xlu0 %1628
  %v1630 = vsel %vm52, %v1427, 0.0
  %v1631 = vadd.f32 %v1426, %v1630
  %1632 = vadd.xlane.f32.xlu0 %v1631
  %v1633 = vpop.xlane.xlu0 %1632
  %v1634 = vsel %vm52, %v1429, 0.0
  %v1635 = vadd.f32 %v1428, %v1634
  %1636 = vadd.xlane.f32.xlu0 %v1635
  %v1637 = vpop.xlane.xlu0 %1636
  %v1638 = vsel %vm52, %v1431, 0.0
  %v1639 = vadd.f32 %v1430, %v1638
  %1640 = vadd.xlane.f32.xlu0 %v1639
  %v1641 = vpop.xlane.xlu0 %1640
  %v1642 = vsel %vm52, %v1433, 0.0
  %v1643 = vadd.f32 %v1432, %v1642
  %1644 = vadd.xlane.f32.xlu0 %v1643
  %v1645 = vpop.xlane.xlu0 %1644
  %v1646 = vsel %vm52, %v1435, 0.0
  %v1647 = vadd.f32 %v1434, %v1646
  %1648 = vadd.xlane.f32.xlu0 %v1647
  %v1649 = vpop.xlane.xlu0 %1648
  %v1650 = vsel %vm52, %v1437, 0.0
  %v1651 = vadd.f32 %v1436, %v1650
  %1652 = vadd.xlane.f32.xlu0 %v1651
  %v1653 = vpop.xlane.xlu0 %1652
  %v1654 = vsel %vm52, %v1439, 0.0
  %v1655 = vadd.f32 %v1438, %v1654
  %1656 = vadd.xlane.f32.xlu0 %v1655
  %v1657 = vpop.xlane.xlu0 %1656
  %v1658 = vsel %vm52, %v1441, 0.0
  %v1659 = vadd.f32 %v1440, %v1658
  %1660 = vadd.xlane.f32.xlu0 %v1659
  %v1661 = vpop.xlane.xlu0 %1660
  %v1662 = vsel %vm52, %v1443, 0.0
  %v1663 = vadd.f32 %v1442, %v1662
  %1664 = vadd.xlane.f32.xlu0 %v1663
  %v1665 = vpop.xlane.xlu0 %1664
  %v1666 = vsel %vm52, %v1445, 0.0
  %v1667 = vadd.f32 %v1444, %v1666
  %1668 = vadd.xlane.f32.xlu0 %v1667
  %v1669 = vpop.xlane.xlu0 %1668
  %v1670 = vsel %vm52, %v1447, 0.0
  %v1671 = vadd.f32 %v1446, %v1670
  %1672 = vadd.xlane.f32.xlu0 %v1671
  %v1673 = vpop.xlane.xlu0 %1672
  %v1674 = vsel %vm52, %v1449, 0.0
  %v1675 = vadd.f32 %v1448, %v1674
  %1676 = vadd.xlane.f32.xlu0 %v1675
  %v1677 = vpop.xlane.xlu0 %1676
  %v1678 = vsel %vm52, %v1451, 0.0
  %v1679 = vadd.f32 %v1450, %v1678
  %1680 = vadd.xlane.f32.xlu0 %v1679
  %v1681 = vpop.xlane.xlu0 %1680
  %v1682 = vsel %vm52, %v1453, 0.0
  %v1683 = vadd.f32 %v1452, %v1682
  %1684 = vadd.xlane.f32.xlu0 %v1683
  %v1685 = vpop.xlane.xlu0 %1684
  %v1686 = vsel %vm52, %v1455, 0.0
  %v1687 = vadd.f32 %v1454, %v1686
  %1688 = vadd.xlane.f32.xlu0 %v1687
  %v1689 = vpop.xlane.xlu0 %1688
  %v1690 = vsel %vm52, %v1457, 0.0
  %v1691 = vadd.f32 %v1456, %v1690
  %1692 = vadd.xlane.f32.xlu0 %v1691
  %v1693 = vpop.xlane.xlu0 %1692
  %v1694 = vsel %vm52, %v1459, 0.0
  %v1695 = vadd.f32 %v1458, %v1694
  %1696 = vadd.xlane.f32.xlu0 %v1695
  %v1697 = vpop.xlane.xlu0 %1696
  %v1698 = vsel %vm52, %v1461, 0.0
  %v1699 = vadd.f32 %v1460, %v1698
  %1700 = vadd.xlane.f32.xlu0 %v1699
  %v1701 = vpop.xlane.xlu0 %1700
  %v1702 = vsel %vm52, %v1463, 0.0
  %v1703 = vadd.f32 %v1462, %v1702
  %1704 = vadd.xlane.f32.xlu0 %v1703
  %v1705 = vpop.xlane.xlu0 %1704
  %v1706 = vsel %vm52, %v1465, 0.0
  %v1707 = vadd.f32 %v1464, %v1706
  %1708 = vadd.xlane.f32.xlu0 %v1707
  %v1709 = vpop.xlane.xlu0 %1708
  %v1710 = vsel %vm52, %v1467, 0.0
  %v1711 = vadd.f32 %v1466, %v1710
  %1712 = vadd.xlane.f32.xlu0 %v1711
  %v1713 = vpop.xlane.xlu0 %1712
  %v1714 = vsel %vm52, %v1469, 0.0
  %v1715 = vadd.f32 %v1468, %v1714
  %1716 = vadd.xlane.f32.xlu0 %v1715
  %v1717 = vpop.xlane.xlu0 %1716
  %v1718 = vsel %vm52, %v1471, 0.0
  %v1719 = vadd.f32 %v1470, %v1718
  %1720 = vadd.xlane.f32.xlu0 %v1719
  %v1721 = vpop.xlane.xlu0 %1720
  %v1722 = vsel %vm52, %v1473, 0.0
  %v1723 = vadd.f32 %v1472, %v1722
  %1724 = vadd.xlane.f32.xlu0 %v1723
  %v1725 = vpop.xlane.xlu0 %1724
  %v1726 = vsel %vm52, %v1475, 0.0
  %v1727 = vadd.f32 %v1474, %v1726
  %1728 = vadd.xlane.f32.xlu0 %v1727
  %v1729 = vpop.xlane.xlu0 %1728
  %v1730 = vsel %vm52, %v1477, 0.0
  %v1731 = vadd.f32 %v1476, %v1730
  %1732 = vadd.xlane.f32.xlu0 %v1731
  %v1733 = vpop.xlane.xlu0 %1732
  %v1734 = vmul.f32 %v1481, 0.0051020407
  %v1735 = vmul.f32 %v1485, 0.0051020407
  %v1736 = vmul.f32 %v1489, 0.0051020407
  %v1737 = vmul.f32 %v1493, 0.0051020407
  %v1738 = vmul.f32 %v1497, 0.0051020407
  %v1739 = vmul.f32 %v1501, 0.0051020407
  %v1740 = vmul.f32 %v1505, 0.0051020407
  %v1741 = vmul.f32 %v1509, 0.0051020407
  %v1742 = vmul.f32 %v1513, 0.0051020407
  %v1743 = vmul.f32 %v1517, 0.0051020407
  %v1744 = vmul.f32 %v1521, 0.0051020407
  %v1745 = vmul.f32 %v1525, 0.0051020407
  %v1746 = vmul.f32 %v1529, 0.0051020407
  %v1747 = vmul.f32 %v1533, 0.0051020407
  %v1748 = vmul.f32 %v1537, 0.0051020407
  %v1749 = vmul.f32 %v1541, 0.0051020407
  %v1750 = vmul.f32 %v1545, 0.0051020407
  %v1751 = vmul.f32 %v1549, 0.0051020407
  %v1752 = vmul.f32 %v1553, 0.0051020407
  %v1753 = vmul.f32 %v1557, 0.0051020407
  %v1754 = vmul.f32 %v1561, 0.0051020407
  %v1755 = vmul.f32 %v1565, 0.0051020407
  %v1756 = vmul.f32 %v1569, 0.0051020407
  %v1757 = vmul.f32 %v1573, 0.0051020407
  %v1758 = vmul.f32 %v1577, 0.0051020407
  %v1759 = vmul.f32 %v1581, 0.0051020407
  %v1760 = vmul.f32 %v1585, 0.0051020407
  %v1761 = vmul.f32 %v1589, 0.0051020407
  %v1762 = vmul.f32 %v1593, 0.0051020407
  %v1763 = vmul.f32 %v1597, 0.0051020407
  %v1764 = vmul.f32 %v1601, 0.0051020407
  %v1765 = vmul.f32 %v1605, 0.0051020407
  %v1766 = vmul.f32 %v1609, 0.0051020407
  %v1767 = vmul.f32 %v1613, 0.0051020407
  %v1768 = vmul.f32 %v1617, 0.0051020407
  %v1769 = vmul.f32 %v1621, 0.0051020407
  %v1770 = vmul.f32 %v1625, 0.0051020407
  %v1771 = vmul.f32 %v1629, 0.0051020407
  %v1772 = vmul.f32 %v1633, 0.0051020407
  %v1773 = vmul.f32 %v1637, 0.0051020407
  %v1774 = vmul.f32 %v1641, 0.0051020407
  %v1775 = vmul.f32 %v1645, 0.0051020407
  %v1776 = vmul.f32 %v1649, 0.0051020407
  %v1777 = vmul.f32 %v1653, 0.0051020407
  %v1778 = vmul.f32 %v1657, 0.0051020407
  %v1779 = vmul.f32 %v1661, 0.0051020407
  %v1780 = vmul.f32 %v1665, 0.0051020407
  %v1781 = vmul.f32 %v1669, 0.0051020407
  %v1782 = vmul.f32 %v1673, 0.0051020407
  %v1783 = vmul.f32 %v1677, 0.0051020407
  %v1784 = vmul.f32 %v1681, 0.0051020407
  %v1785 = vmul.f32 %v1685, 0.0051020407
  %v1786 = vmul.f32 %v1689, 0.0051020407
  %v1787 = vmul.f32 %v1693, 0.0051020407
  %v1788 = vmul.f32 %v1697, 0.0051020407
  %v1789 = vmul.f32 %v1701, 0.0051020407
  %v1790 = vmul.f32 %v1705, 0.0051020407
  %v1791 = vmul.f32 %v1709, 0.0051020407
  %v1792 = vmul.f32 %v1713, 0.0051020407
  %v1793 = vmul.f32 %v1717, 0.0051020407
  %v1794 = vmul.f32 %v1721, 0.0051020407
  %v1795 = vmul.f32 %v1725, 0.0051020407
  %v1796 = vmul.f32 %v1729, 0.0051020407
  %v1797 = vmul.f32 %v1733, 0.0051020407
  %v1798 = vld [vmem:[%s3] sm:$0xff]
  %v1799 = vld [vmem:[%s3 + $0x8] sm:$0xff]
  %v1800 = vld [vmem:[%s3 + $0x10] sm:$0xff]
  %v1801 = vld [vmem:[%s3 + $0x18] sm:$0xff]
  %v1802 = vld [vmem:[%s3 + $0x20] sm:$0xff]
  %v1803 = vld [vmem:[%s3 + $0x28] sm:$0xff]
  %v1804 = vld [vmem:[%s3 + $0x30] sm:$0xff]
  %v1805 = vld [vmem:[%s3 + $0x38] sm:$0xff]
  %v1806 = vld [vmem:[%s3 + $0x40] sm:$0xff]
  %v1807 = vld [vmem:[%s3 + $0x48] sm:$0xff]
  %v1808 = vld [vmem:[%s3 + $0x50] sm:$0xff]
  %v1809 = vld [vmem:[%s3 + $0x58] sm:$0xff]
  %v1810 = vld [vmem:[%s3 + $0x60] sm:$0xff]
  %v1811 = vld [vmem:[%s3 + $0x68] sm:$0xff]
  %v1812 = vld [vmem:[%s3 + $0x70] sm:$0xff]
  %v1813 = vld [vmem:[%s3 + $0x78] sm:$0xff]
  %v1814 = vld [vmem:[%s3 + $0x80] sm:$0xff]
  %v1815 = vld [vmem:[%s3 + $0x88] sm:$0xff]
  %v1816 = vld [vmem:[%s3 + $0x90] sm:$0xff]
  %v1817 = vld [vmem:[%s3 + $0x98] sm:$0xff]
  %v1818 = vld [vmem:[%s3 + $0xa0] sm:$0xff]
  %v1819 = vld [vmem:[%s3 + $0xa8] sm:$0xff]
  %v1820 = vld [vmem:[%s3 + $0xb0] sm:$0xff]
  %v1821 = vld [vmem:[%s3 + $0xb8] sm:$0xff]
  %v1822 = vld [vmem:[%s3 + $0xc0] sm:$0xff]
  %v1823 = vld [vmem:[%s3 + $0xc8] sm:$0xff]
  %v1824 = vld [vmem:[%s3 + $0xd0] sm:$0xff]
  %v1825 = vld [vmem:[%s3 + $0xd8] sm:$0xff]
  %v1826 = vld [vmem:[%s3 + $0xe0] sm:$0xff]
  %v1827 = vld [vmem:[%s3 + $0xe8] sm:$0xff]
  %v1828 = vld [vmem:[%s3 + $0xf0] sm:$0xff]
  %v1829 = vld [vmem:[%s3 + $0xf8] sm:$0xff]
  %v1830 = vld [vmem:[%s3 + $0x100] sm:$0xff]
  %v1831 = vld [vmem:[%s3 + $0x108] sm:$0xff]
  %v1832 = vld [vmem:[%s3 + $0x110] sm:$0xff]
  %v1833 = vld [vmem:[%s3 + $0x118] sm:$0xff]
  %v1834 = vld [vmem:[%s3 + $0x120] sm:$0xff]
  %v1835 = vld [vmem:[%s3 + $0x128] sm:$0xff]
  %v1836 = vld [vmem:[%s3 + $0x130] sm:$0xff]
  %v1837 = vld [vmem:[%s3 + $0x138] sm:$0xff]
  %v1838 = vld [vmem:[%s3 + $0x140] sm:$0xff]
  %v1839 = vld [vmem:[%s3 + $0x148] sm:$0xff]
  %v1840 = vld [vmem:[%s3 + $0x150] sm:$0xff]
  %v1841 = vld [vmem:[%s3 + $0x158] sm:$0xff]
  %v1842 = vld [vmem:[%s3 + $0x160] sm:$0xff]
  %v1843 = vld [vmem:[%s3 + $0x168] sm:$0xff]
  %v1844 = vld [vmem:[%s3 + $0x170] sm:$0xff]
  %v1845 = vld [vmem:[%s3 + $0x178] sm:$0xff]
  %v1846 = vld [vmem:[%s3 + $0x180] sm:$0xff]
  %v1847 = vld [vmem:[%s3 + $0x188] sm:$0xff]
  %v1848 = vld [vmem:[%s3 + $0x190] sm:$0xff]
  %v1849 = vld [vmem:[%s3 + $0x198] sm:$0xff]
  %v1850 = vld [vmem:[%s3 + $0x1a0] sm:$0xff]
  %v1851 = vld [vmem:[%s3 + $0x1a8] sm:$0xff]
  %v1852 = vld [vmem:[%s3 + $0x1b0] sm:$0xff]
  %v1853 = vld [vmem:[%s3 + $0x1b8] sm:$0xff]
  %v1854 = vld [vmem:[%s3 + $0x1c0] sm:$0xff]
  %v1855 = vld [vmem:[%s3 + $0x1c8] sm:$0xff]
  %v1856 = vld [vmem:[%s3 + $0x1d0] sm:$0xff]
  %v1857 = vld [vmem:[%s3 + $0x1d8] sm:$0xff]
  %v1858 = vld [vmem:[%s3 + $0x1e0] sm:$0xff]
  %v1859 = vld [vmem:[%s3 + $0x1e8] sm:$0xff]
  %v1860 = vld [vmem:[%s3 + $0x1f0] sm:$0xff]
  %v1861 = vld [vmem:[%s3 + $0x1f8] sm:$0xff]
  %v1862 = vadd.f32 %v1734, 0.001
  %v1863 = vadd.f32 %v1735, 0.001
  %v1864 = vadd.f32 %v1736, 0.001
  %v1865 = vadd.f32 %v1737, 0.001
  %v1866 = vadd.f32 %v1738, 0.001
  %v1867 = vadd.f32 %v1739, 0.001
  %v1868 = vadd.f32 %v1740, 0.001
  %v1869 = vadd.f32 %v1741, 0.001
  %v1870 = vadd.f32 %v1742, 0.001
  %v1871 = vadd.f32 %v1743, 0.001
  %v1872 = vadd.f32 %v1744, 0.001
  %v1873 = vadd.f32 %v1745, 0.001
  %v1874 = vadd.f32 %v1746, 0.001
  %v1875 = vadd.f32 %v1747, 0.001
  %v1876 = vadd.f32 %v1748, 0.001
  %v1877 = vadd.f32 %v1749, 0.001
  %v1878 = vadd.f32 %v1750, 0.001
  %v1879 = vadd.f32 %v1751, 0.001
  %v1880 = vadd.f32 %v1752, 0.001
  %v1881 = vadd.f32 %v1753, 0.001
  %v1882 = vadd.f32 %v1754, 0.001
  %v1883 = vadd.f32 %v1755, 0.001
  %v1884 = vadd.f32 %v1756, 0.001
  %v1885 = vadd.f32 %v1757, 0.001
  %v1886 = vadd.f32 %v1758, 0.001
  %v1887 = vadd.f32 %v1759, 0.001
  %v1888 = vadd.f32 %v1760, 0.001
  %v1889 = vadd.f32 %v1761, 0.001
  %v1890 = vadd.f32 %v1762, 0.001
  %v1891 = vadd.f32 %v1763, 0.001
  %v1892 = vadd.f32 %v1764, 0.001
  %v1893 = vadd.f32 %v1765, 0.001
  %v1894 = vadd.f32 %v1766, 0.001
  %v1895 = vadd.f32 %v1767, 0.001
  %v1896 = vadd.f32 %v1768, 0.001
  %v1897 = vadd.f32 %v1769, 0.001
  %v1898 = vadd.f32 %v1770, 0.001
  %v1899 = vadd.f32 %v1771, 0.001
  %v1900 = vadd.f32 %v1772, 0.001
  %v1901 = vadd.f32 %v1773, 0.001
  %v1902 = vadd.f32 %v1774, 0.001
  %v1903 = vadd.f32 %v1775, 0.001
  %v1904 = vadd.f32 %v1776, 0.001
  %v1905 = vadd.f32 %v1777, 0.001
  %v1906 = vadd.f32 %v1778, 0.001
  %v1907 = vadd.f32 %v1779, 0.001
  %v1908 = vadd.f32 %v1780, 0.001
  %v1909 = vadd.f32 %v1781, 0.001
  %v1910 = vadd.f32 %v1782, 0.001
  %v1911 = vadd.f32 %v1783, 0.001
  %v1912 = vadd.f32 %v1784, 0.001
  %v1913 = vadd.f32 %v1785, 0.001
  %v1914 = vadd.f32 %v1786, 0.001
  %v1915 = vadd.f32 %v1787, 0.001
  %v1916 = vadd.f32 %v1788, 0.001
  %v1917 = vadd.f32 %v1789, 0.001
  %v1918 = vadd.f32 %v1790, 0.001
  %v1919 = vadd.f32 %v1791, 0.001
  %v1920 = vadd.f32 %v1792, 0.001
  %v1921 = vadd.f32 %v1793, 0.001
  %v1922 = vadd.f32 %v1794, 0.001
  %v1923 = vadd.f32 %v1795, 0.001
  %v1924 = vadd.f32 %v1796, 0.001
  %v1925 = vadd.f32 %v1797, 0.001
  %v1926 = vrsqrt.pop %v1862
  %v1927 = vrsqrt.pop %v1863
  %v1928 = vrsqrt.pop %v1864
  %v1929 = vrsqrt.pop %v1865
  %v1930 = vrsqrt.pop %v1866
  %v1931 = vrsqrt.pop %v1867
  %v1932 = vrsqrt.pop %v1868
  %v1933 = vrsqrt.pop %v1869
  %v1934 = vrsqrt.pop %v1870
  %v1935 = vrsqrt.pop %v1871
  %v1936 = vrsqrt.pop %v1872
  %v1937 = vrsqrt.pop %v1873
  %v1938 = vrsqrt.pop %v1874
  %v1939 = vrsqrt.pop %v1875
  %v1940 = vrsqrt.pop %v1876
  %v1941 = vrsqrt.pop %v1877
  %v1942 = vrsqrt.pop %v1878
  %v1943 = vrsqrt.pop %v1879
  %v1944 = vrsqrt.pop %v1880
  %v1945 = vrsqrt.pop %v1881
  %v1946 = vrsqrt.pop %v1882
  %v1947 = vrsqrt.pop %v1883
  %v1948 = vrsqrt.pop %v1884
  %v1949 = vrsqrt.pop %v1885
  %v1950 = vrsqrt.pop %v1886
  %v1951 = vrsqrt.pop %v1887
  %v1952 = vrsqrt.pop %v1888
  %v1953 = vrsqrt.pop %v1889
  %v1954 = vrsqrt.pop %v1890
  %v1955 = vrsqrt.pop %v1891
  %v1956 = vrsqrt.pop %v1892
  %v1957 = vrsqrt.pop %v1893
  %v1958 = vrsqrt.pop %v1894
  %v1959 = vrsqrt.pop %v1895
  %v1960 = vrsqrt.pop %v1896
  %v1961 = vrsqrt.pop %v1897
  %v1962 = vrsqrt.pop %v1898
  %v1963 = vrsqrt.pop %v1899
  %v1964 = vrsqrt.pop %v1900
  %v1965 = vrsqrt.pop %v1901
  %v1966 = vrsqrt.pop %v1902
  %v1967 = vrsqrt.pop %v1903
  %v1968 = vrsqrt.pop %v1904
  %v1969 = vrsqrt.pop %v1905
  %v1970 = vrsqrt.pop %v1906
  %v1971 = vrsqrt.pop %v1907
  %v1972 = vrsqrt.pop %v1908
  %v1973 = vrsqrt.pop %v1909
  %v1974 = vrsqrt.pop %v1910
  %v1975 = vrsqrt.pop %v1911
  %v1976 = vrsqrt.pop %v1912
  %v1977 = vrsqrt.pop %v1913
  %v1978 = vrsqrt.pop %v1914
  %v1979 = vrsqrt.pop %v1915
  %v1980 = vrsqrt.pop %v1916
  %v1981 = vrsqrt.pop %v1917
  %v1982 = vrsqrt.pop %v1918
  %v1983 = vrsqrt.pop %v1919
  %v1984 = vrsqrt.pop %v1920
  %v1985 = vrsqrt.pop %v1921
  %v1986 = vrsqrt.pop %v1922
  %v1987 = vrsqrt.pop %v1923
  %v1988 = vrsqrt.pop %v1924
  %v1989 = vrsqrt.pop %v1925
  %v1990 = vmul.f32 %v1798, %v1926
  %v1991 = vmul.f32 %v1799, %v1927
  %v1992 = vmul.f32 %v1800, %v1928
  %v1993 = vmul.f32 %v1801, %v1929
  %v1994 = vmul.f32 %v1802, %v1930
  %v1995 = vmul.f32 %v1803, %v1931
  %v1996 = vmul.f32 %v1804, %v1932
  %v1997 = vmul.f32 %v1805, %v1933
  %v1998 = vmul.f32 %v1806, %v1934
  %v1999 = vmul.f32 %v1807, %v1935
  %v2000 = vmul.f32 %v1808, %v1936
  %v2001 = vmul.f32 %v1809, %v1937
  %v2002 = vmul.f32 %v1810, %v1938
  %v2003 = vmul.f32 %v1811, %v1939
  %v2004 = vmul.f32 %v1812, %v1940
  %v2005 = vmul.f32 %v1813, %v1941
  %v2006 = vmul.f32 %v1814, %v1942
  %v2007 = vmul.f32 %v1815, %v1943
  %v2008 = vmul.f32 %v1816, %v1944
  %v2009 = vmul.f32 %v1817, %v1945
  %v2010 = vmul.f32 %v1818, %v1946
  %v2011 = vmul.f32 %v1819, %v1947
  %v2012 = vmul.f32 %v1820, %v1948
  %v2013 = vmul.f32 %v1821, %v1949
  %v2014 = vmul.f32 %v1822, %v1950
  %v2015 = vmul.f32 %v1823, %v1951
  %v2016 = vmul.f32 %v1824, %v1952
  %v2017 = vmul.f32 %v1825, %v1953
  %v2018 = vmul.f32 %v1826, %v1954
  %v2019 = vmul.f32 %v1827, %v1955
  %v2020 = vmul.f32 %v1828, %v1956
  %v2021 = vmul.f32 %v1829, %v1957
  %v2022 = vmul.f32 %v1830, %v1958
  %v2023 = vmul.f32 %v1831, %v1959
  %v2024 = vmul.f32 %v1832, %v1960
  %v2025 = vmul.f32 %v1833, %v1961
  %v2026 = vmul.f32 %v1834, %v1962
  %v2027 = vmul.f32 %v1835, %v1963
  %v2028 = vmul.f32 %v1836, %v1964
  %v2029 = vmul.f32 %v1837, %v1965
  %v2030 = vmul.f32 %v1838, %v1966
  %v2031 = vmul.f32 %v1839, %v1967
  %v2032 = vmul.f32 %v1840, %v1968
  %v2033 = vmul.f32 %v1841, %v1969
  %v2034 = vmul.f32 %v1842, %v1970
  %v2035 = vmul.f32 %v1843, %v1971
  %v2036 = vmul.f32 %v1844, %v1972
  %v2037 = vmul.f32 %v1845, %v1973
  %v2038 = vmul.f32 %v1846, %v1974
  %v2039 = vmul.f32 %v1847, %v1975
  %v2040 = vmul.f32 %v1848, %v1976
  %v2041 = vmul.f32 %v1849, %v1977
  %v2042 = vmul.f32 %v1850, %v1978
  %v2043 = vmul.f32 %v1851, %v1979
  %v2044 = vmul.f32 %v1852, %v1980
  %v2045 = vmul.f32 %v1853, %v1981
  %v2046 = vmul.f32 %v1854, %v1982
  %v2047 = vmul.f32 %v1855, %v1983
  %v2048 = vmul.f32 %v1856, %v1984
  %v2049 = vmul.f32 %v1857, %v1985
  %v2050 = vmul.f32 %v1858, %v1986
  %v2051 = vmul.f32 %v1859, %v1987
  %v2052 = vmul.f32 %v1860, %v1988
  %v2053 = vmul.f32 %v1861, %v1989
  %2055 = vset.pattern.permute.xlu0 0
  %2056 = vperm.xlu0 %2055, %v1990
  %v2057 = vpop.permute.xlu0 %2056
  %2060 = vset.pattern.permute.xlu0 0
  %2061 = vperm.xlu0 %2060, %v1991
  %v2062 = vpop.permute.xlu0 %2061
  %2065 = vset.pattern.permute.xlu0 0
  %2066 = vperm.xlu0 %2065, %v1992
  %v2067 = vpop.permute.xlu0 %2066
  %2070 = vset.pattern.permute.xlu0 0
  %2071 = vperm.xlu0 %2070, %v1993
  %v2072 = vpop.permute.xlu0 %2071
  %2075 = vset.pattern.permute.xlu0 0
  %2076 = vperm.xlu0 %2075, %v1994
  %v2077 = vpop.permute.xlu0 %2076
  %2080 = vset.pattern.permute.xlu0 0
  %2081 = vperm.xlu0 %2080, %v1995
  %v2082 = vpop.permute.xlu0 %2081
  %2085 = vset.pattern.permute.xlu0 0
  %2086 = vperm.xlu0 %2085, %v1996
  %v2087 = vpop.permute.xlu0 %2086
  %2090 = vset.pattern.permute.xlu0 0
  %2091 = vperm.xlu0 %2090, %v1997
  %v2092 = vpop.permute.xlu0 %2091
  %2095 = vset.pattern.permute.xlu0 0
  %2096 = vperm.xlu0 %2095, %v1998
  %v2097 = vpop.permute.xlu0 %2096
  %2100 = vset.pattern.permute.xlu0 0
  %2101 = vperm.xlu0 %2100, %v1999
  %v2102 = vpop.permute.xlu0 %2101
  %2105 = vset.pattern.permute.xlu0 0
  %2106 = vperm.xlu0 %2105, %v2000
  %v2107 = vpop.permute.xlu0 %2106
  %2110 = vset.pattern.permute.xlu0 0
  %2111 = vperm.xlu0 %2110, %v2001
  %v2112 = vpop.permute.xlu0 %2111
  %2115 = vset.pattern.permute.xlu0 0
  %2116 = vperm.xlu0 %2115, %v2002
  %v2117 = vpop.permute.xlu0 %2116
  %2120 = vset.pattern.permute.xlu0 0
  %2121 = vperm.xlu0 %2120, %v2003
  %v2122 = vpop.permute.xlu0 %2121
  %2125 = vset.pattern.permute.xlu0 0
  %2126 = vperm.xlu0 %2125, %v2004
  %v2127 = vpop.permute.xlu0 %2126
  %2130 = vset.pattern.permute.xlu0 0
  %2131 = vperm.xlu0 %2130, %v2005
  %v2132 = vpop.permute.xlu0 %2131
  %2135 = vset.pattern.permute.xlu0 0
  %2136 = vperm.xlu0 %2135, %v2006
  %v2137 = vpop.permute.xlu0 %2136
  %2140 = vset.pattern.permute.xlu0 0
  %2141 = vperm.xlu0 %2140, %v2007
  %v2142 = vpop.permute.xlu0 %2141
  %2145 = vset.pattern.permute.xlu0 0
  %2146 = vperm.xlu0 %2145, %v2008
  %v2147 = vpop.permute.xlu0 %2146
  %2150 = vset.pattern.permute.xlu0 0
  %2151 = vperm.xlu0 %2150, %v2009
  %v2152 = vpop.permute.xlu0 %2151
  %2155 = vset.pattern.permute.xlu0 0
  %2156 = vperm.xlu0 %2155, %v2010
  %v2157 = vpop.permute.xlu0 %2156
  %2160 = vset.pattern.permute.xlu0 0
  %2161 = vperm.xlu0 %2160, %v2011
  %v2162 = vpop.permute.xlu0 %2161
  %2165 = vset.pattern.permute.xlu0 0
  %2166 = vperm.xlu0 %2165, %v2012
  %v2167 = vpop.permute.xlu0 %2166
  %2170 = vset.pattern.permute.xlu0 0
  %2171 = vperm.xlu0 %2170, %v2013
  %v2172 = vpop.permute.xlu0 %2171
  %2175 = vset.pattern.permute.xlu0 0
  %2176 = vperm.xlu0 %2175, %v2014
  %v2177 = vpop.permute.xlu0 %2176
  %2180 = vset.pattern.permute.xlu0 0
  %2181 = vperm.xlu0 %2180, %v2015
  %v2182 = vpop.permute.xlu0 %2181
  %2185 = vset.pattern.permute.xlu0 0
  %2186 = vperm.xlu0 %2185, %v2016
  %v2187 = vpop.permute.xlu0 %2186
  %2190 = vset.pattern.permute.xlu0 0
  %2191 = vperm.xlu0 %2190, %v2017
  %v2192 = vpop.permute.xlu0 %2191
  %2195 = vset.pattern.permute.xlu0 0
  %2196 = vperm.xlu0 %2195, %v2018
  %v2197 = vpop.permute.xlu0 %2196
  %2200 = vset.pattern.permute.xlu0 0
  %2201 = vperm.xlu0 %2200, %v2019
  %v2202 = vpop.permute.xlu0 %2201
  %2205 = vset.pattern.permute.xlu0 0
  %2206 = vperm.xlu0 %2205, %v2020
  %v2207 = vpop.permute.xlu0 %2206
  %2210 = vset.pattern.permute.xlu0 0
  %2211 = vperm.xlu0 %2210, %v2021
  %v2212 = vpop.permute.xlu0 %2211
  %2215 = vset.pattern.permute.xlu0 0
  %2216 = vperm.xlu0 %2215, %v2022
  %v2217 = vpop.permute.xlu0 %2216
  %2220 = vset.pattern.permute.xlu0 0
  %2221 = vperm.xlu0 %2220, %v2023
  %v2222 = vpop.permute.xlu0 %2221
  %2225 = vset.pattern.permute.xlu0 0
  %2226 = vperm.xlu0 %2225, %v2024
  %v2227 = vpop.permute.xlu0 %2226
  %2230 = vset.pattern.permute.xlu0 0
  %2231 = vperm.xlu0 %2230, %v2025
  %v2232 = vpop.permute.xlu0 %2231
  %2235 = vset.pattern.permute.xlu0 0
  %2236 = vperm.xlu0 %2235, %v2026
  %v2237 = vpop.permute.xlu0 %2236
  %2240 = vset.pattern.permute.xlu0 0
  %2241 = vperm.xlu0 %2240, %v2027
  %v2242 = vpop.permute.xlu0 %2241
  %2245 = vset.pattern.permute.xlu0 0
  %2246 = vperm.xlu0 %2245, %v2028
  %v2247 = vpop.permute.xlu0 %2246
  %2250 = vset.pattern.permute.xlu0 0
  %2251 = vperm.xlu0 %2250, %v2029
  %v2252 = vpop.permute.xlu0 %2251
  %2255 = vset.pattern.permute.xlu0 0
  %2256 = vperm.xlu0 %2255, %v2030
  %v2257 = vpop.permute.xlu0 %2256
  %2260 = vset.pattern.permute.xlu0 0
  %2261 = vperm.xlu0 %2260, %v2031
  %v2262 = vpop.permute.xlu0 %2261
  %2265 = vset.pattern.permute.xlu0 0
  %2266 = vperm.xlu0 %2265, %v2032
  %v2267 = vpop.permute.xlu0 %2266
  %2270 = vset.pattern.permute.xlu0 0
  %2271 = vperm.xlu0 %2270, %v2033
  %v2272 = vpop.permute.xlu0 %2271
  %2275 = vset.pattern.permute.xlu0 0
  %2276 = vperm.xlu0 %2275, %v2034
  %v2277 = vpop.permute.xlu0 %2276
  %2280 = vset.pattern.permute.xlu0 0
  %2281 = vperm.xlu0 %2280, %v2035
  %v2282 = vpop.permute.xlu0 %2281
  %2285 = vset.pattern.permute.xlu0 0
  %2286 = vperm.xlu0 %2285, %v2036
  %v2287 = vpop.permute.xlu0 %2286
  %2290 = vset.pattern.permute.xlu0 0
  %2291 = vperm.xlu0 %2290, %v2037
  %v2292 = vpop.permute.xlu0 %2291
  %2295 = vset.pattern.permute.xlu0 0
  %2296 = vperm.xlu0 %2295, %v2038
  %v2297 = vpop.permute.xlu0 %2296
  %2300 = vset.pattern.permute.xlu0 0
  %2301 = vperm.xlu0 %2300, %v2039
  %v2302 = vpop.permute.xlu0 %2301
  %2305 = vset.pattern.permute.xlu0 0
  %2306 = vperm.xlu0 %2305, %v2040
  %v2307 = vpop.permute.xlu0 %2306
  %2310 = vset.pattern.permute.xlu0 0
  %2311 = vperm.xlu0 %2310, %v2041
  %v2312 = vpop.permute.xlu0 %2311
  %2315 = vset.pattern.permute.xlu0 0
  %2316 = vperm.xlu0 %2315, %v2042
  %v2317 = vpop.permute.xlu0 %2316
  %2320 = vset.pattern.permute.xlu0 0
  %2321 = vperm.xlu0 %2320, %v2043
  %v2322 = vpop.permute.xlu0 %2321
  %2325 = vset.pattern.permute.xlu0 0
  %2326 = vperm.xlu0 %2325, %v2044
  %v2327 = vpop.permute.xlu0 %2326
  %2330 = vset.pattern.permute.xlu0 0
  %2331 = vperm.xlu0 %2330, %v2045
  %v2332 = vpop.permute.xlu0 %2331
  %2335 = vset.pattern.permute.xlu0 0
  %2336 = vperm.xlu0 %2335, %v2046
  %v2337 = vpop.permute.xlu0 %2336
  %2340 = vset.pattern.permute.xlu0 0
  %2341 = vperm.xlu0 %2340, %v2047
  %v2342 = vpop.permute.xlu0 %2341
  %2345 = vset.pattern.permute.xlu0 0
  %2346 = vperm.xlu0 %2345, %v2048
  %v2347 = vpop.permute.xlu0 %2346
  %2350 = vset.pattern.permute.xlu0 0
  %2351 = vperm.xlu0 %2350, %v2049
  %v2352 = vpop.permute.xlu0 %2351
  %2355 = vset.pattern.permute.xlu0 0
  %2356 = vperm.xlu0 %2355, %v2050
  %v2357 = vpop.permute.xlu0 %2356
  %2360 = vset.pattern.permute.xlu0 0
  %2361 = vperm.xlu0 %2360, %v2051
  %v2362 = vpop.permute.xlu0 %2361
  %2365 = vset.pattern.permute.xlu0 0
  %2366 = vperm.xlu0 %2365, %v2052
  %v2367 = vpop.permute.xlu0 %2366
  %2370 = vset.pattern.permute.xlu0 0
  %2371 = vperm.xlu0 %2370, %v2053
  %v2372 = vpop.permute.xlu0 %2371
  %v2374 = vmul.f32 %v1222, %v2057
  %v2375 = vmul.f32 %v1223, %v2057
  %v2376 = vmul.f32 %v1224, %v2062
  %v2377 = vmul.f32 %v1225, %v2062
  %v2378 = vmul.f32 %v1226, %v2067
  %v2379 = vmul.f32 %v1227, %v2067
  %v2380 = vmul.f32 %v1228, %v2072
  %v2381 = vmul.f32 %v1229, %v2072
  %v2382 = vmul.f32 %v1230, %v2077
  %v2383 = vmul.f32 %v1231, %v2077
  %v2384 = vmul.f32 %v1232, %v2082
  %v2385 = vmul.f32 %v1233, %v2082
  %v2386 = vmul.f32 %v1234, %v2087
  %v2387 = vmul.f32 %v1235, %v2087
  %v2388 = vmul.f32 %v1236, %v2092
  %v2389 = vmul.f32 %v1237, %v2092
  %v2390 = vmul.f32 %v1238, %v2097
  %v2391 = vmul.f32 %v1239, %v2097
  %v2392 = vmul.f32 %v1240, %v2102
  %v2393 = vmul.f32 %v1241, %v2102
  %v2394 = vmul.f32 %v1242, %v2107
  %v2395 = vmul.f32 %v1243, %v2107
  %v2396 = vmul.f32 %v1244, %v2112
  %v2397 = vmul.f32 %v1245, %v2112
  %v2398 = vmul.f32 %v1246, %v2117
  %v2399 = vmul.f32 %v1247, %v2117
  %v2400 = vmul.f32 %v1248, %v2122
  %v2401 = vmul.f32 %v1249, %v2122
  %v2402 = vmul.f32 %v1250, %v2127
  %v2403 = vmul.f32 %v1251, %v2127
  %v2404 = vmul.f32 %v1252, %v2132
  %v2405 = vmul.f32 %v1253, %v2132
  %v2406 = vmul.f32 %v1254, %v2137
  %v2407 = vmul.f32 %v1255, %v2137
  %v2408 = vmul.f32 %v1256, %v2142
  %v2409 = vmul.f32 %v1257, %v2142
  %v2410 = vmul.f32 %v1258, %v2147
  %v2411 = vmul.f32 %v1259, %v2147
  %v2412 = vmul.f32 %v1260, %v2152
  %v2413 = vmul.f32 %v1261, %v2152
  %v2414 = vmul.f32 %v1262, %v2157
  %v2415 = vmul.f32 %v1263, %v2157
  %v2416 = vmul.f32 %v1264, %v2162
  %v2417 = vmul.f32 %v1265, %v2162
  %v2418 = vmul.f32 %v1266, %v2167
  %v2419 = vmul.f32 %v1267, %v2167
  %v2420 = vmul.f32 %v1268, %v2172
  %v2421 = vmul.f32 %v1269, %v2172
  %v2422 = vmul.f32 %v1270, %v2177
  %v2423 = vmul.f32 %v1271, %v2177
  %v2424 = vmul.f32 %v1272, %v2182
  %v2425 = vmul.f32 %v1273, %v2182
  %v2426 = vmul.f32 %v1274, %v2187
  %v2427 = vmul.f32 %v1275, %v2187
  %v2428 = vmul.f32 %v1276, %v2192
  %v2429 = vmul.f32 %v1277, %v2192
  %v2430 = vmul.f32 %v1278, %v2197
  %v2431 = vmul.f32 %v1279, %v2197
  %v2432 = vmul.f32 %v1280, %v2202
  %v2433 = vmul.f32 %v1281, %v2202
  %v2434 = vmul.f32 %v1282, %v2207
  %v2435 = vmul.f32 %v1283, %v2207
  %v2436 = vmul.f32 %v1284, %v2212
  %v2437 = vmul.f32 %v1285, %v2212
  %v2438 = vmul.f32 %v1286, %v2217
  %v2439 = vmul.f32 %v1287, %v2217
  %v2440 = vmul.f32 %v1288, %v2222
  %v2441 = vmul.f32 %v1289, %v2222
  %v2442 = vmul.f32 %v1290, %v2227
  %v2443 = vmul.f32 %v1291, %v2227
  %v2444 = vmul.f32 %v1292, %v2232
  %v2445 = vmul.f32 %v1293, %v2232
  %v2446 = vmul.f32 %v1294, %v2237
  %v2447 = vmul.f32 %v1295, %v2237
  %v2448 = vmul.f32 %v1296, %v2242
  %v2449 = vmul.f32 %v1297, %v2242
  %v2450 = vmul.f32 %v1298, %v2247
  %v2451 = vmul.f32 %v1299, %v2247
  %v2452 = vmul.f32 %v1300, %v2252
  %v2453 = vmul.f32 %v1301, %v2252
  %v2454 = vmul.f32 %v1302, %v2257
  %v2455 = vmul.f32 %v1303, %v2257
  %v2456 = vmul.f32 %v1304, %v2262
  %v2457 = vmul.f32 %v1305, %v2262
  %v2458 = vmul.f32 %v1306, %v2267
  %v2459 = vmul.f32 %v1307, %v2267
  %v2460 = vmul.f32 %v1308, %v2272
  %v2461 = vmul.f32 %v1309, %v2272
  %v2462 = vmul.f32 %v1310, %v2277
  %v2463 = vmul.f32 %v1311, %v2277
  %v2464 = vmul.f32 %v1312, %v2282
  %v2465 = vmul.f32 %v1313, %v2282
  %v2466 = vmul.f32 %v1314, %v2287
  %v2467 = vmul.f32 %v1315, %v2287
  %v2468 = vmul.f32 %v1316, %v2292
  %v2469 = vmul.f32 %v1317, %v2292
  %v2470 = vmul.f32 %v1318, %v2297
  %v2471 = vmul.f32 %v1319, %v2297
  %v2472 = vmul.f32 %v1320, %v2302
  %v2473 = vmul.f32 %v1321, %v2302
  %v2474 = vmul.f32 %v1322, %v2307
  %v2475 = vmul.f32 %v1323, %v2307
  %v2476 = vmul.f32 %v1324, %v2312
  %v2477 = vmul.f32 %v1325, %v2312
  %v2478 = vmul.f32 %v1326, %v2317
  %v2479 = vmul.f32 %v1327, %v2317
  %v2480 = vmul.f32 %v1328, %v2322
  %v2481 = vmul.f32 %v1329, %v2322
  %v2482 = vmul.f32 %v1330, %v2327
  %v2483 = vmul.f32 %v1331, %v2327
  %v2484 = vmul.f32 %v1332, %v2332
  %v2485 = vmul.f32 %v1333, %v2332
  %v2486 = vmul.f32 %v1334, %v2337
  %v2487 = vmul.f32 %v1335, %v2337
  %v2488 = vmul.f32 %v1336, %v2342
  %v2489 = vmul.f32 %v1337, %v2342
  %v2490 = vmul.f32 %v1338, %v2347
  %v2491 = vmul.f32 %v1339, %v2347
  %v2492 = vmul.f32 %v1340, %v2352
  %v2493 = vmul.f32 %v1341, %v2352
  %v2494 = vmul.f32 %v1342, %v2357
  %v2495 = vmul.f32 %v1343, %v2357
  %v2496 = vmul.f32 %v1344, %v2362
  %v2497 = vmul.f32 %v1345, %v2362
  %v2498 = vmul.f32 %v1346, %v2367
  %v2499 = vmul.f32 %v1347, %v2367
  %v2500 = vmul.f32 %v1348, %v2372
  %v2501 = vmul.f32 %v1349, %v2372
  %v2502 = vld [vmem:[%s4] sm:$0xff]
  %v2503 = vld [vmem:[%s4 + $0x8] sm:$0xff]
  %v2504 = vld [vmem:[%s4 + $0x10] sm:$0xff]
  %v2505 = vld [vmem:[%s4 + $0x18] sm:$0xff]
  %v2506 = vld [vmem:[%s4 + $0x20] sm:$0xff]
  %v2507 = vld [vmem:[%s4 + $0x28] sm:$0xff]
  %v2508 = vld [vmem:[%s4 + $0x30] sm:$0xff]
  %v2509 = vld [vmem:[%s4 + $0x38] sm:$0xff]
  %v2510 = vld [vmem:[%s4 + $0x40] sm:$0xff]
  %v2511 = vld [vmem:[%s4 + $0x48] sm:$0xff]
  %v2512 = vld [vmem:[%s4 + $0x50] sm:$0xff]
  %v2513 = vld [vmem:[%s4 + $0x58] sm:$0xff]
  %v2514 = vld [vmem:[%s4 + $0x60] sm:$0xff]
  %v2515 = vld [vmem:[%s4 + $0x68] sm:$0xff]
  %v2516 = vld [vmem:[%s4 + $0x70] sm:$0xff]
  %v2517 = vld [vmem:[%s4 + $0x78] sm:$0xff]
  %v2518 = vld [vmem:[%s4 + $0x80] sm:$0xff]
  %v2519 = vld [vmem:[%s4 + $0x88] sm:$0xff]
  %v2520 = vld [vmem:[%s4 + $0x90] sm:$0xff]
  %v2521 = vld [vmem:[%s4 + $0x98] sm:$0xff]
  %v2522 = vld [vmem:[%s4 + $0xa0] sm:$0xff]
  %v2523 = vld [vmem:[%s4 + $0xa8] sm:$0xff]
  %v2524 = vld [vmem:[%s4 + $0xb0] sm:$0xff]
  %v2525 = vld [vmem:[%s4 + $0xb8] sm:$0xff]
  %v2526 = vld [vmem:[%s4 + $0xc0] sm:$0xff]
  %v2527 = vld [vmem:[%s4 + $0xc8] sm:$0xff]
  %v2528 = vld [vmem:[%s4 + $0xd0] sm:$0xff]
  %v2529 = vld [vmem:[%s4 + $0xd8] sm:$0xff]
  %v2530 = vld [vmem:[%s4 + $0xe0] sm:$0xff]
  %v2531 = vld [vmem:[%s4 + $0xe8] sm:$0xff]
  %v2532 = vld [vmem:[%s4 + $0xf0] sm:$0xff]
  %v2533 = vld [vmem:[%s4 + $0xf8] sm:$0xff]
  %v2534 = vld [vmem:[%s4 + $0x100] sm:$0xff]
  %v2535 = vld [vmem:[%s4 + $0x108] sm:$0xff]
  %v2536 = vld [vmem:[%s4 + $0x110] sm:$0xff]
  %v2537 = vld [vmem:[%s4 + $0x118] sm:$0xff]
  %v2538 = vld [vmem:[%s4 + $0x120] sm:$0xff]
  %v2539 = vld [vmem:[%s4 + $0x128] sm:$0xff]
  %v2540 = vld [vmem:[%s4 + $0x130] sm:$0xff]
  %v2541 = vld [vmem:[%s4 + $0x138] sm:$0xff]
  %v2542 = vld [vmem:[%s4 + $0x140] sm:$0xff]
  %v2543 = vld [vmem:[%s4 + $0x148] sm:$0xff]
  %v2544 = vld [vmem:[%s4 + $0x150] sm:$0xff]
  %v2545 = vld [vmem:[%s4 + $0x158] sm:$0xff]
  %v2546 = vld [vmem:[%s4 + $0x160] sm:$0xff]
  %v2547 = vld [vmem:[%s4 + $0x168] sm:$0xff]
  %v2548 = vld [vmem:[%s4 + $0x170] sm:$0xff]
  %v2549 = vld [vmem:[%s4 + $0x178] sm:$0xff]
  %v2550 = vld [vmem:[%s4 + $0x180] sm:$0xff]
  %v2551 = vld [vmem:[%s4 + $0x188] sm:$0xff]
  %v2552 = vld [vmem:[%s4 + $0x190] sm:$0xff]
  %v2553 = vld [vmem:[%s4 + $0x198] sm:$0xff]
  %v2554 = vld [vmem:[%s4 + $0x1a0] sm:$0xff]
  %v2555 = vld [vmem:[%s4 + $0x1a8] sm:$0xff]
  %v2556 = vld [vmem:[%s4 + $0x1b0] sm:$0xff]
  %v2557 = vld [vmem:[%s4 + $0x1b8] sm:$0xff]
  %v2558 = vld [vmem:[%s4 + $0x1c0] sm:$0xff]
  %v2559 = vld [vmem:[%s4 + $0x1c8] sm:$0xff]
  %v2560 = vld [vmem:[%s4 + $0x1d0] sm:$0xff]
  %v2561 = vld [vmem:[%s4 + $0x1d8] sm:$0xff]
  %v2562 = vld [vmem:[%s4 + $0x1e0] sm:$0xff]
  %v2563 = vld [vmem:[%s4 + $0x1e8] sm:$0xff]
  %v2564 = vld [vmem:[%s4 + $0x1f0] sm:$0xff]
  %v2565 = vld [vmem:[%s4 + $0x1f8] sm:$0xff]
  %2567 = vset.pattern.permute.xlu0 0
  %2568 = vperm.xlu0 %2567, %v2502
  %v2569 = vpop.permute.xlu0 %2568
  %2572 = vset.pattern.permute.xlu0 0
  %2573 = vperm.xlu0 %2572, %v2503
  %v2574 = vpop.permute.xlu0 %2573
  %2577 = vset.pattern.permute.xlu0 0
  %2578 = vperm.xlu0 %2577, %v2504
  %v2579 = vpop.permute.xlu0 %2578
  %2582 = vset.pattern.permute.xlu0 0
  %2583 = vperm.xlu0 %2582, %v2505
  %v2584 = vpop.permute.xlu0 %2583
  %2587 = vset.pattern.permute.xlu0 0
  %2588 = vperm.xlu0 %2587, %v2506
  %v2589 = vpop.permute.xlu0 %2588
  %2592 = vset.pattern.permute.xlu0 0
  %2593 = vperm.xlu0 %2592, %v2507
  %v2594 = vpop.permute.xlu0 %2593
  %2597 = vset.pattern.permute.xlu0 0
  %2598 = vperm.xlu0 %2597, %v2508
  %v2599 = vpop.permute.xlu0 %2598
  %2602 = vset.pattern.permute.xlu0 0
  %2603 = vperm.xlu0 %2602, %v2509
  %v2604 = vpop.permute.xlu0 %2603
  %2607 = vset.pattern.permute.xlu0 0
  %2608 = vperm.xlu0 %2607, %v2510
  %v2609 = vpop.permute.xlu0 %2608
  %2612 = vset.pattern.permute.xlu0 0
  %2613 = vperm.xlu0 %2612, %v2511
  %v2614 = vpop.permute.xlu0 %2613
  %2617 = vset.pattern.permute.xlu0 0
  %2618 = vperm.xlu0 %2617, %v2512
  %v2619 = vpop.permute.xlu0 %2618
  %2622 = vset.pattern.permute.xlu0 0
  %2623 = vperm.xlu0 %2622, %v2513
  %v2624 = vpop.permute.xlu0 %2623
  %2627 = vset.pattern.permute.xlu0 0
  %2628 = vperm.xlu0 %2627, %v2514
  %v2629 = vpop.permute.xlu0 %2628
  %2632 = vset.pattern.permute.xlu0 0
  %2633 = vperm.xlu0 %2632, %v2515
  %v2634 = vpop.permute.xlu0 %2633
  %2637 = vset.pattern.permute.xlu0 0
  %2638 = vperm.xlu0 %2637, %v2516
  %v2639 = vpop.permute.xlu0 %2638
  %2642 = vset.pattern.permute.xlu0 0
  %2643 = vperm.xlu0 %2642, %v2517
  %v2644 = vpop.permute.xlu0 %2643
  %2647 = vset.pattern.permute.xlu0 0
  %2648 = vperm.xlu0 %2647, %v2518
  %v2649 = vpop.permute.xlu0 %2648
  %2652 = vset.pattern.permute.xlu0 0
  %2653 = vperm.xlu0 %2652, %v2519
  %v2654 = vpop.permute.xlu0 %2653
  %2657 = vset.pattern.permute.xlu0 0
  %2658 = vperm.xlu0 %2657, %v2520
  %v2659 = vpop.permute.xlu0 %2658
  %2662 = vset.pattern.permute.xlu0 0
  %2663 = vperm.xlu0 %2662, %v2521
  %v2664 = vpop.permute.xlu0 %2663
  %2667 = vset.pattern.permute.xlu0 0
  %2668 = vperm.xlu0 %2667, %v2522
  %v2669 = vpop.permute.xlu0 %2668
  %2672 = vset.pattern.permute.xlu0 0
  %2673 = vperm.xlu0 %2672, %v2523
  %v2674 = vpop.permute.xlu0 %2673
  %2677 = vset.pattern.permute.xlu0 0
  %2678 = vperm.xlu0 %2677, %v2524
  %v2679 = vpop.permute.xlu0 %2678
  %2682 = vset.pattern.permute.xlu0 0
  %2683 = vperm.xlu0 %2682, %v2525
  %v2684 = vpop.permute.xlu0 %2683
  %2687 = vset.pattern.permute.xlu0 0
  %2688 = vperm.xlu0 %2687, %v2526
  %v2689 = vpop.permute.xlu0 %2688
  %2692 = vset.pattern.permute.xlu0 0
  %2693 = vperm.xlu0 %2692, %v2527
  %v2694 = vpop.permute.xlu0 %2693
  %2697 = vset.pattern.permute.xlu0 0
  %2698 = vperm.xlu0 %2697, %v2528
  %v2699 = vpop.permute.xlu0 %2698
  %2702 = vset.pattern.permute.xlu0 0
  %2703 = vperm.xlu0 %2702, %v2529
  %v2704 = vpop.permute.xlu0 %2703
  %2707 = vset.pattern.permute.xlu0 0
  %2708 = vperm.xlu0 %2707, %v2530
  %v2709 = vpop.permute.xlu0 %2708
  %2712 = vset.pattern.permute.xlu0 0
  %2713 = vperm.xlu0 %2712, %v2531
  %v2714 = vpop.permute.xlu0 %2713
  %2717 = vset.pattern.permute.xlu0 0
  %2718 = vperm.xlu0 %2717, %v2532
  %v2719 = vpop.permute.xlu0 %2718
  %2722 = vset.pattern.permute.xlu0 0
  %2723 = vperm.xlu0 %2722, %v2533
  %v2724 = vpop.permute.xlu0 %2723
  %2727 = vset.pattern.permute.xlu0 0
  %2728 = vperm.xlu0 %2727, %v2534
  %v2729 = vpop.permute.xlu0 %2728
  %2732 = vset.pattern.permute.xlu0 0
  %2733 = vperm.xlu0 %2732, %v2535
  %v2734 = vpop.permute.xlu0 %2733
  %2737 = vset.pattern.permute.xlu0 0
  %2738 = vperm.xlu0 %2737, %v2536
  %v2739 = vpop.permute.xlu0 %2738
  %2742 = vset.pattern.permute.xlu0 0
  %2743 = vperm.xlu0 %2742, %v2537
  %v2744 = vpop.permute.xlu0 %2743
  %2747 = vset.pattern.permute.xlu0 0
  %2748 = vperm.xlu0 %2747, %v2538
  %v2749 = vpop.permute.xlu0 %2748
  %2752 = vset.pattern.permute.xlu0 0
  %2753 = vperm.xlu0 %2752, %v2539
  %v2754 = vpop.permute.xlu0 %2753
  %2757 = vset.pattern.permute.xlu0 0
  %2758 = vperm.xlu0 %2757, %v2540
  %v2759 = vpop.permute.xlu0 %2758
  %2762 = vset.pattern.permute.xlu0 0
  %2763 = vperm.xlu0 %2762, %v2541
  %v2764 = vpop.permute.xlu0 %2763
  %2767 = vset.pattern.permute.xlu0 0
  %2768 = vperm.xlu0 %2767, %v2542
  %v2769 = vpop.permute.xlu0 %2768
  %2772 = vset.pattern.permute.xlu0 0
  %2773 = vperm.xlu0 %2772, %v2543
  %v2774 = vpop.permute.xlu0 %2773
  %2777 = vset.pattern.permute.xlu0 0
  %2778 = vperm.xlu0 %2777, %v2544
  %v2779 = vpop.permute.xlu0 %2778
  %2782 = vset.pattern.permute.xlu0 0
  %2783 = vperm.xlu0 %2782, %v2545
  %v2784 = vpop.permute.xlu0 %2783
  %2787 = vset.pattern.permute.xlu0 0
  %2788 = vperm.xlu0 %2787, %v2546
  %v2789 = vpop.permute.xlu0 %2788
  %2792 = vset.pattern.permute.xlu0 0
  %2793 = vperm.xlu0 %2792, %v2547
  %v2794 = vpop.permute.xlu0 %2793
  %2797 = vset.pattern.permute.xlu0 0
  %2798 = vperm.xlu0 %2797, %v2548
  %v2799 = vpop.permute.xlu0 %2798
  %2802 = vset.pattern.permute.xlu0 0
  %2803 = vperm.xlu0 %2802, %v2549
  %v2804 = vpop.permute.xlu0 %2803
  %2807 = vset.pattern.permute.xlu0 0
  %2808 = vperm.xlu0 %2807, %v2550
  %v2809 = vpop.permute.xlu0 %2808
  %2812 = vset.pattern.permute.xlu0 0
  %2813 = vperm.xlu0 %2812, %v2551
  %v2814 = vpop.permute.xlu0 %2813
  %2817 = vset.pattern.permute.xlu0 0
  %2818 = vperm.xlu0 %2817, %v2552
  %v2819 = vpop.permute.xlu0 %2818
  %2822 = vset.pattern.permute.xlu0 0
  %2823 = vperm.xlu0 %2822, %v2553
  %v2824 = vpop.permute.xlu0 %2823
  %2827 = vset.pattern.permute.xlu0 0
  %2828 = vperm.xlu0 %2827, %v2554
  %v2829 = vpop.permute.xlu0 %2828
  %2832 = vset.pattern.permute.xlu0 0
  %2833 = vperm.xlu0 %2832, %v2555
  %v2834 = vpop.permute.xlu0 %2833
  %2837 = vset.pattern.permute.xlu0 0
  %2838 = vperm.xlu0 %2837, %v2556
  %v2839 = vpop.permute.xlu0 %2838
  %2842 = vset.pattern.permute.xlu0 0
  %2843 = vperm.xlu0 %2842, %v2557
  %v2844 = vpop.permute.xlu0 %2843
  %2847 = vset.pattern.permute.xlu0 0
  %2848 = vperm.xlu0 %2847, %v2558
  %v2849 = vpop.permute.xlu0 %2848
  %2852 = vset.pattern.permute.xlu0 0
  %2853 = vperm.xlu0 %2852, %v2559
  %v2854 = vpop.permute.xlu0 %2853
  %2857 = vset.pattern.permute.xlu0 0
  %2858 = vperm.xlu0 %2857, %v2560
  %v2859 = vpop.permute.xlu0 %2858
  %2862 = vset.pattern.permute.xlu0 0
  %2863 = vperm.xlu0 %2862, %v2561
  %v2864 = vpop.permute.xlu0 %2863
  %2867 = vset.pattern.permute.xlu0 0
  %2868 = vperm.xlu0 %2867, %v2562
  %v2869 = vpop.permute.xlu0 %2868
  %2872 = vset.pattern.permute.xlu0 0
  %2873 = vperm.xlu0 %2872, %v2563
  %v2874 = vpop.permute.xlu0 %2873
  %2877 = vset.pattern.permute.xlu0 0
  %2878 = vperm.xlu0 %2877, %v2564
  %v2879 = vpop.permute.xlu0 %2878
  %2882 = vset.pattern.permute.xlu0 0
  %2883 = vperm.xlu0 %2882, %v2565
  %v2884 = vpop.permute.xlu0 %2883
  %v2886 = vadd.f32 %v2374, %v2569
  %v2887 = vadd.f32 %v2375, %v2569
  %v2888 = vadd.f32 %v2376, %v2574
  %v2889 = vadd.f32 %v2377, %v2574
  %v2890 = vadd.f32 %v2378, %v2579
  %v2891 = vadd.f32 %v2379, %v2579
  %v2892 = vadd.f32 %v2380, %v2584
  %v2893 = vadd.f32 %v2381, %v2584
  %v2894 = vadd.f32 %v2382, %v2589
  %v2895 = vadd.f32 %v2383, %v2589
  %v2896 = vadd.f32 %v2384, %v2594
  %v2897 = vadd.f32 %v2385, %v2594
  %v2898 = vadd.f32 %v2386, %v2599
  %v2899 = vadd.f32 %v2387, %v2599
  %v2900 = vadd.f32 %v2388, %v2604
  %v2901 = vadd.f32 %v2389, %v2604
  %v2902 = vadd.f32 %v2390, %v2609
  %v2903 = vadd.f32 %v2391, %v2609
  %v2904 = vadd.f32 %v2392, %v2614
  %v2905 = vadd.f32 %v2393, %v2614
  %v2906 = vadd.f32 %v2394, %v2619
  %v2907 = vadd.f32 %v2395, %v2619
  %v2908 = vadd.f32 %v2396, %v2624
  %v2909 = vadd.f32 %v2397, %v2624
  %v2910 = vadd.f32 %v2398, %v2629
  %v2911 = vadd.f32 %v2399, %v2629
  %v2912 = vadd.f32 %v2400, %v2634
  %v2913 = vadd.f32 %v2401, %v2634
  %v2914 = vadd.f32 %v2402, %v2639
  %v2915 = vadd.f32 %v2403, %v2639
  %v2916 = vadd.f32 %v2404, %v2644
  %v2917 = vadd.f32 %v2405, %v2644
  %v2918 = vadd.f32 %v2406, %v2649
  %v2919 = vadd.f32 %v2407, %v2649
  %v2920 = vadd.f32 %v2408, %v2654
  %v2921 = vadd.f32 %v2409, %v2654
  %v2922 = vadd.f32 %v2410, %v2659
  %v2923 = vadd.f32 %v2411, %v2659
  %v2924 = vadd.f32 %v2412, %v2664
  %v2925 = vadd.f32 %v2413, %v2664
  %v2926 = vadd.f32 %v2414, %v2669
  %v2927 = vadd.f32 %v2415, %v2669
  %v2928 = vadd.f32 %v2416, %v2674
  %v2929 = vadd.f32 %v2417, %v2674
  %v2930 = vadd.f32 %v2418, %v2679
  %v2931 = vadd.f32 %v2419, %v2679
  %v2932 = vadd.f32 %v2420, %v2684
  %v2933 = vadd.f32 %v2421, %v2684
  %v2934 = vadd.f32 %v2422, %v2689
  %v2935 = vadd.f32 %v2423, %v2689
  %v2936 = vadd.f32 %v2424, %v2694
  %v2937 = vadd.f32 %v2425, %v2694
  %v2938 = vadd.f32 %v2426, %v2699
  %v2939 = vadd.f32 %v2427, %v2699
  %v2940 = vadd.f32 %v2428, %v2704
  %v2941 = vadd.f32 %v2429, %v2704
  %v2942 = vadd.f32 %v2430, %v2709
  %v2943 = vadd.f32 %v2431, %v2709
  %v2944 = vadd.f32 %v2432, %v2714
  %v2945 = vadd.f32 %v2433, %v2714
  %v2946 = vadd.f32 %v2434, %v2719
  %v2947 = vadd.f32 %v2435, %v2719
  %v2948 = vadd.f32 %v2436, %v2724
  %v2949 = vadd.f32 %v2437, %v2724
  %v2950 = vadd.f32 %v2438, %v2729
  %v2951 = vadd.f32 %v2439, %v2729
  %v2952 = vadd.f32 %v2440, %v2734
  %v2953 = vadd.f32 %v2441, %v2734
  %v2954 = vadd.f32 %v2442, %v2739
  %v2955 = vadd.f32 %v2443, %v2739
  %v2956 = vadd.f32 %v2444, %v2744
  %v2957 = vadd.f32 %v2445, %v2744
  %v2958 = vadd.f32 %v2446, %v2749
  %v2959 = vadd.f32 %v2447, %v2749
  %v2960 = vadd.f32 %v2448, %v2754
  %v2961 = vadd.f32 %v2449, %v2754
  %v2962 = vadd.f32 %v2450, %v2759
  %v2963 = vadd.f32 %v2451, %v2759
  %v2964 = vadd.f32 %v2452, %v2764
  %v2965 = vadd.f32 %v2453, %v2764
  %v2966 = vadd.f32 %v2454, %v2769
  %v2967 = vadd.f32 %v2455, %v2769
  %v2968 = vadd.f32 %v2456, %v2774
  %v2969 = vadd.f32 %v2457, %v2774
  %v2970 = vadd.f32 %v2458, %v2779
  %v2971 = vadd.f32 %v2459, %v2779
  %v2972 = vadd.f32 %v2460, %v2784
  %v2973 = vadd.f32 %v2461, %v2784
  %v2974 = vadd.f32 %v2462, %v2789
  %v2975 = vadd.f32 %v2463, %v2789
  %v2976 = vadd.f32 %v2464, %v2794
  %v2977 = vadd.f32 %v2465, %v2794
  %v2978 = vadd.f32 %v2466, %v2799
  %v2979 = vadd.f32 %v2467, %v2799
  %v2980 = vadd.f32 %v2468, %v2804
  %v2981 = vadd.f32 %v2469, %v2804
  %v2982 = vadd.f32 %v2470, %v2809
  %v2983 = vadd.f32 %v2471, %v2809
  %v2984 = vadd.f32 %v2472, %v2814
  %v2985 = vadd.f32 %v2473, %v2814
  %v2986 = vadd.f32 %v2474, %v2819
  %v2987 = vadd.f32 %v2475, %v2819
  %v2988 = vadd.f32 %v2476, %v2824
  %v2989 = vadd.f32 %v2477, %v2824
  %v2990 = vadd.f32 %v2478, %v2829
  %v2991 = vadd.f32 %v2479, %v2829
  %v2992 = vadd.f32 %v2480, %v2834
  %v2993 = vadd.f32 %v2481, %v2834
  %v2994 = vadd.f32 %v2482, %v2839
  %v2995 = vadd.f32 %v2483, %v2839
  %v2996 = vadd.f32 %v2484, %v2844
  %v2997 = vadd.f32 %v2485, %v2844
  %v2998 = vadd.f32 %v2486, %v2849
  %v2999 = vadd.f32 %v2487, %v2849
  %v3000 = vadd.f32 %v2488, %v2854
  %v3001 = vadd.f32 %v2489, %v2854
  %v3002 = vadd.f32 %v2490, %v2859
  %v3003 = vadd.f32 %v2491, %v2859
  %v3004 = vadd.f32 %v2492, %v2864
  %v3005 = vadd.f32 %v2493, %v2864
  %v3006 = vadd.f32 %v2494, %v2869
  %v3007 = vadd.f32 %v2495, %v2869
  %v3008 = vadd.f32 %v2496, %v2874
  %v3009 = vadd.f32 %v2497, %v2874
  %v3010 = vadd.f32 %v2498, %v2879
  %v3011 = vadd.f32 %v2499, %v2879
  %v3012 = vadd.f32 %v2500, %v2884
  %v3013 = vadd.f32 %v2501, %v2884
  %3014 = vst [vmem:[%s5] sm:$0xff] %v2886
  %3015 = vst.msk [vmem:[%s5 + $0x8] sm:$0xff] %vm52, %v2887
  %3016 = vst [vmem:[%s5 + $0x10] sm:$0xff] %v2888
  %3017 = vst.msk [vmem:[%s5 + $0x18] sm:$0xff] %vm52, %v2889
  %3018 = vst [vmem:[%s5 + $0x20] sm:$0xff] %v2890
  %3019 = vst.msk [vmem:[%s5 + $0x28] sm:$0xff] %vm52, %v2891
  %3020 = vst [vmem:[%s5 + $0x30] sm:$0xff] %v2892
  %3021 = vst.msk [vmem:[%s5 + $0x38] sm:$0xff] %vm52, %v2893
  %3022 = vst [vmem:[%s5 + $0x40] sm:$0xff] %v2894
  %3023 = vst.msk [vmem:[%s5 + $0x48] sm:$0xff] %vm52, %v2895
  %3024 = vst [vmem:[%s5 + $0x50] sm:$0xff] %v2896
  %3025 = vst.msk [vmem:[%s5 + $0x58] sm:$0xff] %vm52, %v2897
  %3026 = vst [vmem:[%s5 + $0x60] sm:$0xff] %v2898
  %3027 = vst.msk [vmem:[%s5 + $0x68] sm:$0xff] %vm52, %v2899
  %3028 = vst [vmem:[%s5 + $0x70] sm:$0xff] %v2900
  %3029 = vst.msk [vmem:[%s5 + $0x78] sm:$0xff] %vm52, %v2901
  %3030 = vst [vmem:[%s5 + $0x80] sm:$0xff] %v2902
  %3031 = vst.msk [vmem:[%s5 + $0x88] sm:$0xff] %vm52, %v2903
  %3032 = vst [vmem:[%s5 + $0x90] sm:$0xff] %v2904
  %3033 = vst.msk [vmem:[%s5 + $0x98] sm:$0xff] %vm52, %v2905
  %3034 = vst [vmem:[%s5 + $0xa0] sm:$0xff] %v2906
  %3035 = vst.msk [vmem:[%s5 + $0xa8] sm:$0xff] %vm52, %v2907
  %3036 = vst [vmem:[%s5 + $0xb0] sm:$0xff] %v2908
  %3037 = vst.msk [vmem:[%s5 + $0xb8] sm:$0xff] %vm52, %v2909
  %3038 = vst [vmem:[%s5 + $0xc0] sm:$0xff] %v2910
  %3039 = vst.msk [vmem:[%s5 + $0xc8] sm:$0xff] %vm52, %v2911
  %3040 = vst [vmem:[%s5 + $0xd0] sm:$0xff] %v2912
  %3041 = vst.msk [vmem:[%s5 + $0xd8] sm:$0xff] %vm52, %v2913
  %3042 = vst [vmem:[%s5 + $0xe0] sm:$0xff] %v2914
  %3043 = vst.msk [vmem:[%s5 + $0xe8] sm:$0xff] %vm52, %v2915
  %3044 = vst [vmem:[%s5 + $0xf0] sm:$0xff] %v2916
  %3045 = vst.msk [vmem:[%s5 + $0xf8] sm:$0xff] %vm52, %v2917
  %3046 = vst [vmem:[%s5 + $0x100] sm:$0xff] %v2918
  %3047 = vst.msk [vmem:[%s5 + $0x108] sm:$0xff] %vm52, %v2919
  %3048 = vst [vmem:[%s5 + $0x110] sm:$0xff] %v2920
  %3049 = vst.msk [vmem:[%s5 + $0x118] sm:$0xff] %vm52, %v2921
  %3050 = vst [vmem:[%s5 + $0x120] sm:$0xff] %v2922
  %3051 = vst.msk [vmem:[%s5 + $0x128] sm:$0xff] %vm52, %v2923
  %3052 = vst [vmem:[%s5 + $0x130] sm:$0xff] %v2924
  %3053 = vst.msk [vmem:[%s5 + $0x138] sm:$0xff] %vm52, %v2925
  %3054 = vst [vmem:[%s5 + $0x140] sm:$0xff] %v2926
  %3055 = vst.msk [vmem:[%s5 + $0x148] sm:$0xff] %vm52, %v2927
  %3056 = vst [vmem:[%s5 + $0x150] sm:$0xff] %v2928
  %3057 = vst.msk [vmem:[%s5 + $0x158] sm:$0xff] %vm52, %v2929
  %3058 = vst [vmem:[%s5 + $0x160] sm:$0xff] %v2930
  %3059 = vst.msk [vmem:[%s5 + $0x168] sm:$0xff] %vm52, %v2931
  %3060 = vst [vmem:[%s5 + $0x170] sm:$0xff] %v2932
  %3061 = vst.msk [vmem:[%s5 + $0x178] sm:$0xff] %vm52, %v2933
  %3062 = vst [vmem:[%s5 + $0x180] sm:$0xff] %v2934
  %3063 = vst.msk [vmem:[%s5 + $0x188] sm:$0xff] %vm52, %v2935
  %3064 = vst [vmem:[%s5 + $0x190] sm:$0xff] %v2936
  %3065 = vst.msk [vmem:[%s5 + $0x198] sm:$0xff] %vm52, %v2937
  %3066 = vst [vmem:[%s5 + $0x1a0] sm:$0xff] %v2938
  %3067 = vst.msk [vmem:[%s5 + $0x1a8] sm:$0xff] %vm52, %v2939
  %3068 = vst [vmem:[%s5 + $0x1b0] sm:$0xff] %v2940
  %3069 = vst.msk [vmem:[%s5 + $0x1b8] sm:$0xff] %vm52, %v2941
  %3070 = vst [vmem:[%s5 + $0x1c0] sm:$0xff] %v2942
  %3071 = vst.msk [vmem:[%s5 + $0x1c8] sm:$0xff] %vm52, %v2943
  %3072 = vst [vmem:[%s5 + $0x1d0] sm:$0xff] %v2944
  %3073 = vst.msk [vmem:[%s5 + $0x1d8] sm:$0xff] %vm52, %v2945
  %3074 = vst [vmem:[%s5 + $0x1e0] sm:$0xff] %v2946
  %3075 = vst.msk [vmem:[%s5 + $0x1e8] sm:$0xff] %vm52, %v2947
  %3076 = vst [vmem:[%s5 + $0x1f0] sm:$0xff] %v2948
  %3077 = vst.msk [vmem:[%s5 + $0x1f8] sm:$0xff] %vm52, %v2949
  %3078 = vst [vmem:[%s5 + $0x200] sm:$0xff] %v2950
  %3079 = vst.msk [vmem:[%s5 + $0x208] sm:$0xff] %vm52, %v2951
  %3080 = vst [vmem:[%s5 + $0x210] sm:$0xff] %v2952
  %3081 = vst.msk [vmem:[%s5 + $0x218] sm:$0xff] %vm52, %v2953
  %3082 = vst [vmem:[%s5 + $0x220] sm:$0xff] %v2954
  %3083 = vst.msk [vmem:[%s5 + $0x228] sm:$0xff] %vm52, %v2955
  %3084 = vst [vmem:[%s5 + $0x230] sm:$0xff] %v2956
  %3085 = vst.msk [vmem:[%s5 + $0x238] sm:$0xff] %vm52, %v2957
  %3086 = vst [vmem:[%s5 + $0x240] sm:$0xff] %v2958
  %3087 = vst.msk [vmem:[%s5 + $0x248] sm:$0xff] %vm52, %v2959
  %3088 = vst [vmem:[%s5 + $0x250] sm:$0xff] %v2960
  %3089 = vst.msk [vmem:[%s5 + $0x258] sm:$0xff] %vm52, %v2961
  %3090 = vst [vmem:[%s5 + $0x260] sm:$0xff] %v2962
  %3091 = vst.msk [vmem:[%s5 + $0x268] sm:$0xff] %vm52, %v2963
  %3092 = vst [vmem:[%s5 + $0x270] sm:$0xff] %v2964
  %3093 = vst.msk [vmem:[%s5 + $0x278] sm:$0xff] %vm52, %v2965
  %3094 = vst [vmem:[%s5 + $0x280] sm:$0xff] %v2966
  %3095 = vst.msk [vmem:[%s5 + $0x288] sm:$0xff] %vm52, %v2967
  %3096 = vst [vmem:[%s5 + $0x290] sm:$0xff] %v2968
  %3097 = vst.msk [vmem:[%s5 + $0x298] sm:$0xff] %vm52, %v2969
  %3098 = vst [vmem:[%s5 + $0x2a0] sm:$0xff] %v2970
  %3099 = vst.msk [vmem:[%s5 + $0x2a8] sm:$0xff] %vm52, %v2971
  %3100 = vst [vmem:[%s5 + $0x2b0] sm:$0xff] %v2972
  %3101 = vst.msk [vmem:[%s5 + $0x2b8] sm:$0xff] %vm52, %v2973
  %3102 = vst [vmem:[%s5 + $0x2c0] sm:$0xff] %v2974
  %3103 = vst.msk [vmem:[%s5 + $0x2c8] sm:$0xff] %vm52, %v2975
  %3104 = vst [vmem:[%s5 + $0x2d0] sm:$0xff] %v2976
  %3105 = vst.msk [vmem:[%s5 + $0x2d8] sm:$0xff] %vm52, %v2977
  %3106 = vst [vmem:[%s5 + $0x2e0] sm:$0xff] %v2978
  %3107 = vst.msk [vmem:[%s5 + $0x2e8] sm:$0xff] %vm52, %v2979
  %3108 = vst [vmem:[%s5 + $0x2f0] sm:$0xff] %v2980
  %3109 = vst.msk [vmem:[%s5 + $0x2f8] sm:$0xff] %vm52, %v2981
  %3110 = vst [vmem:[%s5 + $0x300] sm:$0xff] %v2982
  %3111 = vst.msk [vmem:[%s5 + $0x308] sm:$0xff] %vm52, %v2983
  %3112 = vst [vmem:[%s5 + $0x310] sm:$0xff] %v2984
  %3113 = vst.msk [vmem:[%s5 + $0x318] sm:$0xff] %vm52, %v2985
  %3114 = vst [vmem:[%s5 + $0x320] sm:$0xff] %v2986
  %3115 = vst.msk [vmem:[%s5 + $0x328] sm:$0xff] %vm52, %v2987
  %3116 = vst [vmem:[%s5 + $0x330] sm:$0xff] %v2988
  %3117 = vst.msk [vmem:[%s5 + $0x338] sm:$0xff] %vm52, %v2989
  %3118 = vst [vmem:[%s5 + $0x340] sm:$0xff] %v2990
  %3119 = vst.msk [vmem:[%s5 + $0x348] sm:$0xff] %vm52, %v2991
  %3120 = vst [vmem:[%s5 + $0x350] sm:$0xff] %v2992
  %3121 = vst.msk [vmem:[%s5 + $0x358] sm:$0xff] %vm52, %v2993
  %3122 = vst [vmem:[%s5 + $0x360] sm:$0xff] %v2994
  %3123 = vst.msk [vmem:[%s5 + $0x368] sm:$0xff] %vm52, %v2995
  %3124 = vst [vmem:[%s5 + $0x370] sm:$0xff] %v2996
  %3125 = vst.msk [vmem:[%s5 + $0x378] sm:$0xff] %vm52, %v2997
  %3126 = vst [vmem:[%s5 + $0x380] sm:$0xff] %v2998
  %3127 = vst.msk [vmem:[%s5 + $0x388] sm:$0xff] %vm52, %v2999
  %3128 = vst [vmem:[%s5 + $0x390] sm:$0xff] %v3000
  %3129 = vst.msk [vmem:[%s5 + $0x398] sm:$0xff] %vm52, %v3001
  %3130 = vst [vmem:[%s5 + $0x3a0] sm:$0xff] %v3002
  %3131 = vst.msk [vmem:[%s5 + $0x3a8] sm:$0xff] %vm52, %v3003
  %3132 = vst [vmem:[%s5 + $0x3b0] sm:$0xff] %v3004
  %3133 = vst.msk [vmem:[%s5 + $0x3b8] sm:$0xff] %vm52, %v3005
  %3134 = vst [vmem:[%s5 + $0x3c0] sm:$0xff] %v3006
  %3135 = vst.msk [vmem:[%s5 + $0x3c8] sm:$0xff] %vm52, %v3007
  %3136 = vst [vmem:[%s5 + $0x3d0] sm:$0xff] %v3008
  %3137 = vst.msk [vmem:[%s5 + $0x3d8] sm:$0xff] %vm52, %v3009
  %3138 = vst [vmem:[%s5 + $0x3e0] sm:$0xff] %v3010
  %3139 = vst.msk [vmem:[%s5 + $0x3e8] sm:$0xff] %vm52, %v3011
  %3140 = vst [vmem:[%s5 + $0x3f0] sm:$0xff] %v3012
  %3141 = vst.msk [vmem:[%s5 + $0x3f8] sm:$0xff] %vm52, %v3013
  // Predicated region
  $region22: #{tpu_custom_call.1} parent=0 // pred_check
    _
  $region23: #{tpu_custom_call.1} parent=0 // pred_check_branch
    %3143 = sbr.rel (0) target = $region25
  $region24: #{tpu_custom_call.1} parent=0 // pred_region
    _
  $region25: #{tpu_custom_call.1} parent=0 // pred_fallthru
    _
  // Predicated region
  $region26: #{tpu_custom_call.1} parent=0 // pred_check
    _
  $region27: #{tpu_custom_call.1} parent=0 // pred_check_branch
    %3145 = sbr.rel (0) target = $region29
  $region28: #{tpu_custom_call.1} parent=0 // pred_region
    _
  $region29: #{tpu_custom_call.1} parent=0 // pred_fallthru
    _

</llo_original>
